<compile_context>
chip_gen: v7x
topology: tpu7x:2x2x1
jax: 0.10.0
libtpu: 0.0.40
codegen_flags: <defaults>
</compile_context>

<pallas_src>
import functools

import jax
import jax.numpy as jnp
from jax.experimental import pallas as pl
from jax.experimental.pallas import tpu as pltpu


def _basicblock_kernel(x_ref, w1_ref, b1_ref, w2_ref, b2_ref, m_ref, out_ref,
                       xpad_ref, hpad_ref, *, H, W, Cin, Cout, cdt):
    HW = H * W
    PADW = (H + 2) * W + 2          # flat row-padded width: W+1 zeros | H*W interior | W+1 zeros

    x = x_ref[0]                    # (Cin, HW) f32 -- also the residual (already in VMEM)

    # Column-edge validity masks (1, HW): kill row-boundary leakage of the +-1 x-shifts.
    m_left = m_ref[0:1, :]          # valid where x > 0      (for ox = -1 taps)
    m_right = m_ref[1:2, :]         # valid where x < W - 1  (for ox = +1 taps)

    # ---- stage input into the flat-halo scratch (zero only the pad strips) ----------
    xpad_ref[:, 0:W + 1] = jnp.zeros((Cin, W + 1), jnp.float32)
    xpad_ref[:, W + 1 + HW:PADW] = jnp.zeros((Cin, W + 1), jnp.float32)
    xpad_ref[:, W + 1:W + 1 + HW] = x

    hpad_ref[:, 0:W + 1] = jnp.zeros((Cout, W + 1), jnp.float32)
    hpad_ref[:, W + 1 + HW:PADW] = jnp.zeros((Cout, W + 1), jnp.float32)

    def conv3x3(src_ref, w_ref):
        """9 shifted-window matmuls on the flattened-pixel layout -> (Cout, HW) f32."""
        acc = jnp.zeros((Cout, HW), jnp.float32)
        for dx in range(3):                           # ox = dx - 1
            part = jnp.zeros((Cout, HW), jnp.float32)
            for dy in range(3):                       # oy = dy - 1
                start = (W + 1) + (dy - 1) * W + (dx - 1)
                win = src_ref[:, start:start + HW]    # (C, HW), static lane-offset slice
                part = part + jnp.dot(w_ref[dy * 3 + dx], win.astype(cdt),
                                      preferred_element_type=jnp.float32)
            if dx == 0:
                part = part * m_left
            elif dx == 2:
                part = part * m_right
            acc = acc + part
        return acc

    # ---- conv1 (BN1 scale folded into w1) + bias + relu ------------------------------
    h1 = jnp.maximum(conv3x3(xpad_ref, w1_ref) + b1_ref[...], 0.0)   # (Cout, HW) f32
    hpad_ref[:, W + 1:W + 1 + HW] = h1

    # ---- conv2 (BN2 scale folded into w2) + bias + residual + relu -------------------
    acc2 = conv3x3(hpad_ref, w2_ref)
    out = jnp.maximum(acc2 + b2_ref[...] + x, 0.0)
    out_ref[0] = out.astype(out_ref.dtype)


def basic_block_pallas(x_nchw, params, *, compute_dtype=jnp.bfloat16):
    """x_nchw: (N, C, H, W) float32. Returns NCHW float32."""
    w1, s1, b1 = params["w1"], params["scale1"], params["bias1"]
    w2, s2, b2 = params["w2"], params["scale2"], params["bias2"]
    N, Cin, H, W = x_nchw.shape
    Cout = w1.shape[-1]
    assert Cin == Cout, "downsample=None requires inplanes == planes"
    HW = H * W

    # Channels-major, pixels flattened onto the lane axis (a pure reshape of NCHW).
    x_flat = x_nchw.reshape(N, Cin, HW).astype(jnp.float32)

    # Fold BN scale into the conv weights (output-channel axis), transpose to
    # (tap, Cout, Cin) so each tap is a ready-to-use (Cout, Cin) matmul LHS.
    w1t = jnp.transpose(w1 * s1, (0, 1, 3, 2)).reshape(9, Cout, Cin).astype(compute_dtype)
    w2t = jnp.transpose(w2 * s2, (0, 1, 3, 2)).reshape(9, Cout, Cout).astype(compute_dtype)
    b1c = b1.reshape(Cout, 1).astype(jnp.float32)
    b2c = b2.reshape(Cout, 1).astype(jnp.float32)

    # Column-edge validity masks for the flattened-pixel shifts.
    xpos = jnp.arange(HW, dtype=jnp.int32) % W
    masks = jnp.stack([(xpos != 0), (xpos != W - 1)]).astype(jnp.float32)   # (2, HW)

    kernel = functools.partial(_basicblock_kernel, H=H, W=W, Cin=Cin, Cout=Cout,
                               cdt=compute_dtype)

    out_flat = pl.pallas_call(
        kernel,
        out_shape=jax.ShapeDtypeStruct((N, Cout, HW), jnp.float32),
        grid_spec=pltpu.PrefetchScalarGridSpec(
            num_scalar_prefetch=0,
            grid=(N,),
            in_specs=[
                pl.BlockSpec((1, Cin, HW), lambda n: (n, 0, 0)),     # x (flattened NCHW)
                pl.BlockSpec((9, Cout, Cin), lambda n: (0, 0, 0)),   # conv1 w (scale folded)
                pl.BlockSpec((Cout, 1), lambda n: (0, 0)),           # bn1 bias
                pl.BlockSpec((9, Cout, Cout), lambda n: (0, 0, 0)),  # conv2 w (scale folded)
                pl.BlockSpec((Cout, 1), lambda n: (0, 0)),           # bn2 bias
                pl.BlockSpec((2, HW), lambda n: (0, 0)),             # edge masks
            ],
            out_specs=pl.BlockSpec((1, Cout, HW), lambda n: (n, 0, 0)),
            scratch_shapes=[
                pltpu.VMEM((Cin, (H + 2) * W + 2), jnp.float32),     # flat-halo input
                pltpu.VMEM((Cout, (H + 2) * W + 2), jnp.float32),    # flat-halo conv1 output
            ],
        ),
        compiler_params=pltpu.CompilerParams(
            dimension_semantics=("parallel",),      # batch steps independent
            vmem_limit_bytes=32 * 1024 * 1024,
        ),
    )(x_flat, w1t, b1c, w2t, b2c, masks)

    return out_flat.reshape(N, Cout, H, W)


def make_params(key, inplanes, planes, eps=1e-5):
    """Deterministic synthetic parameters; BN folded into (scale, bias) (eval mode)."""
    ks = jax.random.split(key, 10)
    w1 = 0.1 * jax.random.normal(ks[0], (3, 3, inplanes, planes), jnp.float32)  # HWIO
    w2 = 0.1 * jax.random.normal(ks[1], (3, 3, planes, planes), jnp.float32)
    g1 = 1.0 + 0.1 * jax.random.normal(ks[2], (planes,), jnp.float32)
    be1 = 0.1 * jax.random.normal(ks[3], (planes,), jnp.float32)
    m1 = 0.1 * jax.random.normal(ks[4], (planes,), jnp.float32)
    v1 = jnp.abs(jax.random.normal(ks[5], (planes,), jnp.float32)) + 0.5
    g2 = 1.0 + 0.1 * jax.random.normal(ks[6], (planes,), jnp.float32)
    be2 = 0.1 * jax.random.normal(ks[7], (planes,), jnp.float32)
    m2 = 0.1 * jax.random.normal(ks[8], (planes,), jnp.float32)
    v2 = jnp.abs(jax.random.normal(ks[9], (planes,), jnp.float32)) + 0.5
    s1 = g1 / jnp.sqrt(v1 + eps)
    b1 = be1 - m1 * s1
    s2 = g2 / jnp.sqrt(v2 + eps)
    b2 = be2 - m2 * s2
    return {"w1": w1, "scale1": s1, "bias1": b1,
            "w2": w2, "scale2": s2, "bias2": b2}


def basic_block_reference(x_nchw, params):
    """Pure-JAX reference for correctness checking."""
    x = jnp.transpose(x_nchw, (0, 2, 3, 1))

    def conv(z, w):
        return jax.lax.conv_general_dilated(
            z, w, window_strides=(1, 1), padding="SAME",
            dimension_numbers=("NHWC", "HWIO", "NHWC"))

    h = jax.nn.relu(conv(x, params["w1"]) * params["scale1"] + params["bias1"])
    o = conv(h, params["w2"]) * params["scale2"] + params["bias2"] + x
    o = jax.nn.relu(o)
    return jnp.transpose(o, (0, 3, 1, 2))


if __name__ == "__main__":
    key = jax.random.PRNGKey(0)
    kx, kp = jax.random.split(key)

    N, C, H, W = 2, 4, 16, 16           # inplanes == planes == 4, stride=1, downsample=None
    x = jax.random.normal(kx, (N, C, H, W), jnp.float32)
    params = make_params(kp, C, C)

    ref = basic_block_reference(x, params)

    # Tight check with a float32 compute path (exact structural match).
    out_f32 = jax.block_until_ready(basic_block_pallas(x, params, compute_dtype=jnp.float32))
    assert out_f32.shape == (N, C, H, W)
    assert jnp.allclose(out_f32, ref, rtol=1e-4, atol=1e-4), "f32 mismatch vs JAX reference"

    # Default (performance) path: bf16 MXU operands, f32 accumulation.
    out_bf16 = jax.block_until_ready(basic_block_pallas(x, params))
    assert out_bf16.shape == (N, C, H, W)
    assert jnp.allclose(out_bf16, ref, rtol=5e-2, atol=7.5e-2), "bf16 mismatch vs JAX reference"

    print("KERNEL_OK")
</pallas_src>

<mosaic_0001>
module attributes {stable_mosaic.version = 11 : i64} {
  func.func @_basicblock_kernel(%arg0: i32, %arg1: memref<1x4x256xf32, #tpu.memory_space<vmem>>, %arg2: memref<9x4x4xf32, #tpu.memory_space<vmem>>, %arg3: memref<4x1xf32, #tpu.memory_space<vmem>>, %arg4: memref<9x4x4xf32, #tpu.memory_space<vmem>>, %arg5: memref<4x1xf32, #tpu.memory_space<vmem>>, %arg6: memref<2x256xf32, #tpu.memory_space<vmem>>, %arg7: memref<1x4x256xf32, #tpu.memory_space<vmem>>, %arg8: memref<4x290xf32, #tpu.memory_space<vmem>>, %arg9: memref<4x290xf32, #tpu.memory_space<vmem>>) attributes {dimension_semantics = [#tpu.dimension_semantics<parallel>], iteration_bounds = array<i64: 2>, scalar_prefetch = 0 : i64, scratch_operands = 2 : i64, tpu.core_type = #tpu.core_type<tc>, window_params = [{transform_indices = @transform_0, window_bounds = array<i64: 1, 4, 256>}, {pipeline_mode = #tpu.pipeline_mode<synchronous>, transform_indices = @transform_1, window_bounds = array<i64: 9, 4, 4>}, {pipeline_mode = #tpu.pipeline_mode<synchronous>, transform_indices = @transform_2, window_bounds = array<i64: 4, 1>}, {pipeline_mode = #tpu.pipeline_mode<synchronous>, transform_indices = @transform_3, window_bounds = array<i64: 9, 4, 4>}, {pipeline_mode = #tpu.pipeline_mode<synchronous>, transform_indices = @transform_4, window_bounds = array<i64: 4, 1>}, {pipeline_mode = #tpu.pipeline_mode<synchronous>, transform_indices = @transform_5, window_bounds = array<i64: 2, 256>}, {transform_indices = @transform_6, window_bounds = array<i64: 1, 4, 256>}]} {
    %c0 = arith.constant 0 : index
    %c0_0 = arith.constant 0 : index
    %c0_1 = arith.constant 0 : index
    %0 = vector.load %arg1[%c0, %c0_0, %c0_1] : memref<1x4x256xf32, #tpu.memory_space<vmem>>, vector<1x4x256xf32>
    %1 = vector.shape_cast %0 : vector<1x4x256xf32> to vector<4x256xf32>
    %c0_2 = arith.constant 0 : index
    %c0_3 = arith.constant 0 : index
    %2 = vector.load %arg6[%c0_2, %c0_3] : memref<2x256xf32, #tpu.memory_space<vmem>>, vector<1x256xf32>
    %c1 = arith.constant 1 : index
    %c0_4 = arith.constant 0 : index
    %3 = vector.load %arg6[%c1, %c0_4] : memref<2x256xf32, #tpu.memory_space<vmem>>, vector<1x256xf32>
    %cst = arith.constant 0.000000e+00 : f32
    %4 = vector.broadcast %cst : f32 to vector<4x17xf32>
    %c0_5 = arith.constant 0 : index
    %c0_6 = arith.constant 0 : index
    %5 = vector.load %arg8[%c0_5, %c0_6] : memref<4x290xf32, #tpu.memory_space<vmem>>, vector<4x17xf32>
    tpu.vector_store %arg8[%c0_5, %c0_6], %4 {strides = array<i32>} : memref<4x290xf32, #tpu.memory_space<vmem>>, vector<4x17xf32>,
    %cst_7 = arith.constant 0.000000e+00 : f32
    %6 = vector.broadcast %cst_7 : f32 to vector<4x17xf32>
    %c0_8 = arith.constant 0 : index
    %c273 = arith.constant 273 : index
    %7 = vector.load %arg8[%c0_8, %c273] : memref<4x290xf32, #tpu.memory_space<vmem>>, vector<4x17xf32>
    tpu.vector_store %arg8[%c0_8, %c273], %6 {strides = array<i32>} : memref<4x290xf32, #tpu.memory_space<vmem>>, vector<4x17xf32>,
    %c0_9 = arith.constant 0 : index
    %c17 = arith.constant 17 : index
    %8 = vector.load %arg8[%c0_9, %c17] : memref<4x290xf32, #tpu.memory_space<vmem>>, vector<4x256xf32>
    tpu.vector_store %arg8[%c0_9, %c17], %1 {strides = array<i32>} : memref<4x290xf32, #tpu.memory_space<vmem>>, vector<4x256xf32>,
    %cst_10 = arith.constant 0.000000e+00 : f32
    %9 = vector.broadcast %cst_10 : f32 to vector<4x17xf32>
    %c0_11 = arith.constant 0 : index
    %c0_12 = arith.constant 0 : index
    %10 = vector.load %arg9[%c0_11, %c0_12] : memref<4x290xf32, #tpu.memory_space<vmem>>, vector<4x17xf32>
    tpu.vector_store %arg9[%c0_11, %c0_12], %9 {strides = array<i32>} : memref<4x290xf32, #tpu.memory_space<vmem>>, vector<4x17xf32>,
    %cst_13 = arith.constant 0.000000e+00 : f32
    %11 = vector.broadcast %cst_13 : f32 to vector<4x17xf32>
    %c0_14 = arith.constant 0 : index
    %c273_15 = arith.constant 273 : index
    %12 = vector.load %arg9[%c0_14, %c273_15] : memref<4x290xf32, #tpu.memory_space<vmem>>, vector<4x17xf32>
    tpu.vector_store %arg9[%c0_14, %c273_15], %11 {strides = array<i32>} : memref<4x290xf32, #tpu.memory_space<vmem>>, vector<4x17xf32>,
    %cst_16 = arith.constant 0.000000e+00 : f32
    %13 = vector.broadcast %cst_16 : f32 to vector<4x256xf32>
    %cst_17 = arith.constant 0.000000e+00 : f32
    %14 = vector.broadcast %cst_17 : f32 to vector<4x256xf32>
    %c0_18 = arith.constant 0 : index
    %c0_19 = arith.constant 0 : index
    %15 = vector.load %arg8[%c0_18, %c0_19] : memref<4x290xf32, #tpu.memory_space<vmem>>, vector<4x256xf32>
    %c0_20 = arith.constant 0 : index
    %c0_21 = arith.constant 0 : index
    %c0_22 = arith.constant 0 : index
    %16 = vector.load %arg2[%c0_20, %c0_21, %c0_22] : memref<9x4x4xf32, #tpu.memory_space<vmem>>, vector<1x4x4xf32>
    %17 = vector.shape_cast %16 : vector<1x4x4xf32> to vector<4x4xf32>
    %cst_23 = arith.constant dense<0.000000e+00> : vector<4x256xf32>
    %18 = tpu.matmul %17, %15, %cst_23 {dimension_numbers = #tpu.dot_dimension_numbers<[1], [0], [0], [1], [0, 0, 1, 1], [], []>} : vector<4x4xf32>, vector<4x256xf32>, vector<4x256xf32> -> vector<4x256xf32>
    %19 = arith.addf %14, %18 : vector<4x256xf32>
    %c0_24 = arith.constant 0 : index
    %c16 = arith.constant 16 : index
    %20 = vector.load %arg8[%c0_24, %c16] : memref<4x290xf32, #tpu.memory_space<vmem>>, vector<4x256xf32>
    %c3 = arith.constant 3 : index
    %c0_25 = arith.constant 0 : index
    %c0_26 = arith.constant 0 : index
    %21 = vector.load %arg2[%c3, %c0_25, %c0_26] : memref<9x4x4xf32, #tpu.memory_space<vmem>>, vector<1x4x4xf32>
    %22 = vector.shape_cast %21 : vector<1x4x4xf32> to vector<4x4xf32>
    %cst_27 = arith.constant dense<0.000000e+00> : vector<4x256xf32>
    %23 = tpu.matmul %22, %20, %cst_27 {dimension_numbers = #tpu.dot_dimension_numbers<[1], [0], [0], [1], [0, 0, 1, 1], [], []>} : vector<4x4xf32>, vector<4x256xf32>, vector<4x256xf32> -> vector<4x256xf32>
    %24 = arith.addf %19, %23 : vector<4x256xf32>
    %c0_28 = arith.constant 0 : index
    %c32 = arith.constant 32 : index
    %25 = vector.load %arg8[%c0_28, %c32] : memref<4x290xf32, #tpu.memory_space<vmem>>, vector<4x256xf32>
    %c6 = arith.constant 6 : index
    %c0_29 = arith.constant 0 : index
    %c0_30 = arith.constant 0 : index
    %26 = vector.load %arg2[%c6, %c0_29, %c0_30] : memref<9x4x4xf32, #tpu.memory_space<vmem>>, vector<1x4x4xf32>
    %27 = vector.shape_cast %26 : vector<1x4x4xf32> to vector<4x4xf32>
    %cst_31 = arith.constant dense<0.000000e+00> : vector<4x256xf32>
    %28 = tpu.matmul %27, %25, %cst_31 {dimension_numbers = #tpu.dot_dimension_numbers<[1], [0], [0], [1], [0, 0, 1, 1], [], []>} : vector<4x4xf32>, vector<4x256xf32>, vector<4x256xf32> -> vector<4x256xf32>
    %29 = arith.addf %24, %28 : vector<4x256xf32>
    %30 = vector.broadcast %2 : vector<1x256xf32> to vector<4x256xf32>
    %31 = arith.mulf %29, %30 : vector<4x256xf32>
    %32 = arith.addf %13, %31 : vector<4x256xf32>
    %cst_32 = arith.constant 0.000000e+00 : f32
    %33 = vector.broadcast %cst_32 : f32 to vector<4x256xf32>
    %c0_33 = arith.constant 0 : index
    %c1_34 = arith.constant 1 : index
    %34 = vector.load %arg8[%c0_33, %c1_34] : memref<4x290xf32, #tpu.memory_space<vmem>>, vector<4x256xf32>
    %c1_35 = arith.constant 1 : index
    %c0_36 = arith.constant 0 : index
    %c0_37 = arith.constant 0 : index
    %35 = vector.load %arg2[%c1_35, %c0_36, %c0_37] : memref<9x4x4xf32, #tpu.memory_space<vmem>>, vector<1x4x4xf32>
    %36 = vector.shape_cast %35 : vector<1x4x4xf32> to vector<4x4xf32>
    %cst_38 = arith.constant dense<0.000000e+00> : vector<4x256xf32>
    %37 = tpu.matmul %36, %34, %cst_38 {dimension_numbers = #tpu.dot_dimension_numbers<[1], [0], [0], [1], [0, 0, 1, 1], [], []>} : vector<4x4xf32>, vector<4x256xf32>, vector<4x256xf32> -> vector<4x256xf32>
    %38 = arith.addf %33, %37 : vector<4x256xf32>
    %c0_39 = arith.constant 0 : index
    %c17_40 = arith.constant 17 : index
    %39 = vector.load %arg8[%c0_39, %c17_40] : memref<4x290xf32, #tpu.memory_space<vmem>>, vector<4x256xf32>
    %c4 = arith.constant 4 : index
    %c0_41 = arith.constant 0 : index
    %c0_42 = arith.constant 0 : index
    %40 = vector.load %arg2[%c4, %c0_41, %c0_42] : memref<9x4x4xf32, #tpu.memory_space<vmem>>, vector<1x4x4xf32>
    %41 = vector.shape_cast %40 : vector<1x4x4xf32> to vector<4x4xf32>
    %cst_43 = arith.constant dense<0.000000e+00> : vector<4x256xf32>
    %42 = tpu.matmul %41, %39, %cst_43 {dimension_numbers = #tpu.dot_dimension_numbers<[1], [0], [0], [1], [0, 0, 1, 1], [], []>} : vector<4x4xf32>, vector<4x256xf32>, vector<4x256xf32> -> vector<4x256xf32>
    %43 = arith.addf %38, %42 : vector<4x256xf32>
    %c0_44 = arith.constant 0 : index
    %c33 = arith.constant 33 : index
    %44 = vector.load %arg8[%c0_44, %c33] : memref<4x290xf32, #tpu.memory_space<vmem>>, vector<4x256xf32>
    %c7 = arith.constant 7 : index
    %c0_45 = arith.constant 0 : index
    %c0_46 = arith.constant 0 : index
    %45 = vector.load %arg2[%c7, %c0_45, %c0_46] : memref<9x4x4xf32, #tpu.memory_space<vmem>>, vector<1x4x4xf32>
    %46 = vector.shape_cast %45 : vector<1x4x4xf32> to vector<4x4xf32>
    %cst_47 = arith.constant dense<0.000000e+00> : vector<4x256xf32>
    %47 = tpu.matmul %46, %44, %cst_47 {dimension_numbers = #tpu.dot_dimension_numbers<[1], [0], [0], [1], [0, 0, 1, 1], [], []>} : vector<4x4xf32>, vector<4x256xf32>, vector<4x256xf32> -> vector<4x256xf32>
    %48 = arith.addf %43, %47 : vector<4x256xf32>
    %49 = arith.addf %32, %48 : vector<4x256xf32>
    %cst_48 = arith.constant 0.000000e+00 : f32
    %50 = vector.broadcast %cst_48 : f32 to vector<4x256xf32>
    %c0_49 = arith.constant 0 : index
    %c2 = arith.constant 2 : index
    %51 = vector.load %arg8[%c0_49, %c2] : memref<4x290xf32, #tpu.memory_space<vmem>>, vector<4x256xf32>
    %c2_50 = arith.constant 2 : index
    %c0_51 = arith.constant 0 : index
    %c0_52 = arith.constant 0 : index
    %52 = vector.load %arg2[%c2_50, %c0_51, %c0_52] : memref<9x4x4xf32, #tpu.memory_space<vmem>>, vector<1x4x4xf32>
    %53 = vector.shape_cast %52 : vector<1x4x4xf32> to vector<4x4xf32>
    %cst_53 = arith.constant dense<0.000000e+00> : vector<4x256xf32>
    %54 = tpu.matmul %53, %51, %cst_53 {dimension_numbers = #tpu.dot_dimension_numbers<[1], [0], [0], [1], [0, 0, 1, 1], [], []>} : vector<4x4xf32>, vector<4x256xf32>, vector<4x256xf32> -> vector<4x256xf32>
    %55 = arith.addf %50, %54 : vector<4x256xf32>
    %c0_54 = arith.constant 0 : index
    %c18 = arith.constant 18 : index
    %56 = vector.load %arg8[%c0_54, %c18] : memref<4x290xf32, #tpu.memory_space<vmem>>, vector<4x256xf32>
    %c5 = arith.constant 5 : index
    %c0_55 = arith.constant 0 : index
    %c0_56 = arith.constant 0 : index
    %57 = vector.load %arg2[%c5, %c0_55, %c0_56] : memref<9x4x4xf32, #tpu.memory_space<vmem>>, vector<1x4x4xf32>
    %58 = vector.shape_cast %57 : vector<1x4x4xf32> to vector<4x4xf32>
    %cst_57 = arith.constant dense<0.000000e+00> : vector<4x256xf32>
    %59 = tpu.matmul %58, %56, %cst_57 {dimension_numbers = #tpu.dot_dimension_numbers<[1], [0], [0], [1], [0, 0, 1, 1], [], []>} : vector<4x4xf32>, vector<4x256xf32>, vector<4x256xf32> -> vector<4x256xf32>
    %60 = arith.addf %55, %59 : vector<4x256xf32>
    %c0_58 = arith.constant 0 : index
    %c34 = arith.constant 34 : index
    %61 = vector.load %arg8[%c0_58, %c34] : memref<4x290xf32, #tpu.memory_space<vmem>>, vector<4x256xf32>
    %c8 = arith.constant 8 : index
    %c0_59 = arith.constant 0 : index
    %c0_60 = arith.constant 0 : index
    %62 = vector.load %arg2[%c8, %c0_59, %c0_60] : memref<9x4x4xf32, #tpu.memory_space<vmem>>, vector<1x4x4xf32>
    %63 = vector.shape_cast %62 : vector<1x4x4xf32> to vector<4x4xf32>
    %cst_61 = arith.constant dense<0.000000e+00> : vector<4x256xf32>
    %64 = tpu.matmul %63, %61, %cst_61 {dimension_numbers = #tpu.dot_dimension_numbers<[1], [0], [0], [1], [0, 0, 1, 1], [], []>} : vector<4x4xf32>, vector<4x256xf32>, vector<4x256xf32> -> vector<4x256xf32>
    %65 = arith.addf %60, %64 : vector<4x256xf32>
    %66 = vector.broadcast %3 : vector<1x256xf32> to vector<4x256xf32>
    %67 = arith.mulf %65, %66 : vector<4x256xf32>
    %68 = arith.addf %49, %67 : vector<4x256xf32>
    %c0_62 = arith.constant 0 : index
    %c0_63 = arith.constant 0 : index
    %69 = vector.load %arg3[%c0_62, %c0_63] : memref<4x1xf32, #tpu.memory_space<vmem>>, vector<4x1xf32>
    %70 = vector.broadcast %69 : vector<4x1xf32> to vector<4x256xf32>
    %71 = arith.addf %68, %70 : vector<4x256xf32>
    %cst_64 = arith.constant 0.000000e+00 : f32
    %72 = vector.broadcast %cst_64 : f32 to vector<4x256xf32>
    %73 = arith.maximumf %71, %72 : vector<4x256xf32>
    %c0_65 = arith.constant 0 : index
    %c17_66 = arith.constant 17 : index
    %74 = vector.load %arg9[%c0_65, %c17_66] : memref<4x290xf32, #tpu.memory_space<vmem>>, vector<4x256xf32>
    tpu.vector_store %arg9[%c0_65, %c17_66], %73 {strides = array<i32>} : memref<4x290xf32, #tpu.memory_space<vmem>>, vector<4x256xf32>,
    %cst_67 = arith.constant 0.000000e+00 : f32
    %75 = vector.broadcast %cst_67 : f32 to vector<4x256xf32>
    %cst_68 = arith.constant 0.000000e+00 : f32
    %76 = vector.broadcast %cst_68 : f32 to vector<4x256xf32>
    %c0_69 = arith.constant 0 : index
    %c0_70 = arith.constant 0 : index
    %77 = vector.load %arg9[%c0_69, %c0_70] : memref<4x290xf32, #tpu.memory_space<vmem>>, vector<4x256xf32>
    %c0_71 = arith.constant 0 : index
    %c0_72 = arith.constant 0 : index
    %c0_73 = arith.constant 0 : index
    %78 = vector.load %arg4[%c0_71, %c0_72, %c0_73] : memref<9x4x4xf32, #tpu.memory_space<vmem>>, vector<1x4x4xf32>
    %79 = vector.shape_cast %78 : vector<1x4x4xf32> to vector<4x4xf32>
    %cst_74 = arith.constant dense<0.000000e+00> : vector<4x256xf32>
    %80 = tpu.matmul %79, %77, %cst_74 {dimension_numbers = #tpu.dot_dimension_numbers<[1], [0], [0], [1], [0, 0, 1, 1], [], []>} : vector<4x4xf32>, vector<4x256xf32>, vector<4x256xf32> -> vector<4x256xf32>
    %81 = arith.addf %76, %80 : vector<4x256xf32>
    %c0_75 = arith.constant 0 : index
    %c16_76 = arith.constant 16 : index
    %82 = vector.load %arg9[%c0_75, %c16_76] : memref<4x290xf32, #tpu.memory_space<vmem>>, vector<4x256xf32>
    %c3_77 = arith.constant 3 : index
    %c0_78 = arith.constant 0 : index
    %c0_79 = arith.constant 0 : index
    %83 = vector.load %arg4[%c3_77, %c0_78, %c0_79] : memref<9x4x4xf32, #tpu.memory_space<vmem>>, vector<1x4x4xf32>
    %84 = vector.shape_cast %83 : vector<1x4x4xf32> to vector<4x4xf32>
    %cst_80 = arith.constant dense<0.000000e+00> : vector<4x256xf32>
    %85 = tpu.matmul %84, %82, %cst_80 {dimension_numbers = #tpu.dot_dimension_numbers<[1], [0], [0], [1], [0, 0, 1, 1], [], []>} : vector<4x4xf32>, vector<4x256xf32>, vector<4x256xf32> -> vector<4x256xf32>
    %86 = arith.addf %81, %85 : vector<4x256xf32>
    %c0_81 = arith.constant 0 : index
    %c32_82 = arith.constant 32 : index
    %87 = vector.load %arg9[%c0_81, %c32_82] : memref<4x290xf32, #tpu.memory_space<vmem>>, vector<4x256xf32>
    %c6_83 = arith.constant 6 : index
    %c0_84 = arith.constant 0 : index
    %c0_85 = arith.constant 0 : index
    %88 = vector.load %arg4[%c6_83, %c0_84, %c0_85] : memref<9x4x4xf32, #tpu.memory_space<vmem>>, vector<1x4x4xf32>
    %89 = vector.shape_cast %88 : vector<1x4x4xf32> to vector<4x4xf32>
    %cst_86 = arith.constant dense<0.000000e+00> : vector<4x256xf32>
    %90 = tpu.matmul %89, %87, %cst_86 {dimension_numbers = #tpu.dot_dimension_numbers<[1], [0], [0], [1], [0, 0, 1, 1], [], []>} : vector<4x4xf32>, vector<4x256xf32>, vector<4x256xf32> -> vector<4x256xf32>
    %91 = arith.addf %86, %90 : vector<4x256xf32>
    %92 = vector.broadcast %2 : vector<1x256xf32> to vector<4x256xf32>
    %93 = arith.mulf %91, %92 : vector<4x256xf32>
    %94 = arith.addf %75, %93 : vector<4x256xf32>
    %cst_87 = arith.constant 0.000000e+00 : f32
    %95 = vector.broadcast %cst_87 : f32 to vector<4x256xf32>
    %c0_88 = arith.constant 0 : index
    %c1_89 = arith.constant 1 : index
    %96 = vector.load %arg9[%c0_88, %c1_89] : memref<4x290xf32, #tpu.memory_space<vmem>>, vector<4x256xf32>
    %c1_90 = arith.constant 1 : index
    %c0_91 = arith.constant 0 : index
    %c0_92 = arith.constant 0 : index
    %97 = vector.load %arg4[%c1_90, %c0_91, %c0_92] : memref<9x4x4xf32, #tpu.memory_space<vmem>>, vector<1x4x4xf32>
    %98 = vector.shape_cast %97 : vector<1x4x4xf32> to vector<4x4xf32>
    %cst_93 = arith.constant dense<0.000000e+00> : vector<4x256xf32>
    %99 = tpu.matmul %98, %96, %cst_93 {dimension_numbers = #tpu.dot_dimension_numbers<[1], [0], [0], [1], [0, 0, 1, 1], [], []>} : vector<4x4xf32>, vector<4x256xf32>, vector<4x256xf32> -> vector<4x256xf32>
    %100 = arith.addf %95, %99 : vector<4x256xf32>
    %c0_94 = arith.constant 0 : index
    %c17_95 = arith.constant 17 : index
    %101 = vector.load %arg9[%c0_94, %c17_95] : memref<4x290xf32, #tpu.memory_space<vmem>>, vector<4x256xf32>
    %c4_96 = arith.constant 4 : index
    %c0_97 = arith.constant 0 : index
    %c0_98 = arith.constant 0 : index
    %102 = vector.load %arg4[%c4_96, %c0_97, %c0_98] : memref<9x4x4xf32, #tpu.memory_space<vmem>>, vector<1x4x4xf32>
    %103 = vector.shape_cast %102 : vector<1x4x4xf32> to vector<4x4xf32>
    %cst_99 = arith.constant dense<0.000000e+00> : vector<4x256xf32>
    %104 = tpu.matmul %103, %101, %cst_99 {dimension_numbers = #tpu.dot_dimension_numbers<[1], [0], [0], [1], [0, 0, 1, 1], [], []>} : vector<4x4xf32>, vector<4x256xf32>, vector<4x256xf32> -> vector<4x256xf32>
    %105 = arith.addf %100, %104 : vector<4x256xf32>
    %c0_100 = arith.constant 0 : index
    %c33_101 = arith.constant 33 : index
    %106 = vector.load %arg9[%c0_100, %c33_101] : memref<4x290xf32, #tpu.memory_space<vmem>>, vector<4x256xf32>
    %c7_102 = arith.constant 7 : index
    %c0_103 = arith.constant 0 : index
    %c0_104 = arith.constant 0 : index
    %107 = vector.load %arg4[%c7_102, %c0_103, %c0_104] : memref<9x4x4xf32, #tpu.memory_space<vmem>>, vector<1x4x4xf32>
    %108 = vector.shape_cast %107 : vector<1x4x4xf32> to vector<4x4xf32>
    %cst_105 = arith.constant dense<0.000000e+00> : vector<4x256xf32>
    %109 = tpu.matmul %108, %106, %cst_105 {dimension_numbers = #tpu.dot_dimension_numbers<[1], [0], [0], [1], [0, 0, 1, 1], [], []>} : vector<4x4xf32>, vector<4x256xf32>, vector<4x256xf32> -> vector<4x256xf32>
    %110 = arith.addf %105, %109 : vector<4x256xf32>
    %111 = arith.addf %94, %110 : vector<4x256xf32>
    %cst_106 = arith.constant 0.000000e+00 : f32
    %112 = vector.broadcast %cst_106 : f32 to vector<4x256xf32>
    %c0_107 = arith.constant 0 : index
    %c2_108 = arith.constant 2 : index
    %113 = vector.load %arg9[%c0_107, %c2_108] : memref<4x290xf32, #tpu.memory_space<vmem>>, vector<4x256xf32>
    %c2_109 = arith.constant 2 : index
    %c0_110 = arith.constant 0 : index
    %c0_111 = arith.constant 0 : index
    %114 = vector.load %arg4[%c2_109, %c0_110, %c0_111] : memref<9x4x4xf32, #tpu.memory_space<vmem>>, vector<1x4x4xf32>
    %115 = vector.shape_cast %114 : vector<1x4x4xf32> to vector<4x4xf32>
    %cst_112 = arith.constant dense<0.000000e+00> : vector<4x256xf32>
    %116 = tpu.matmul %115, %113, %cst_112 {dimension_numbers = #tpu.dot_dimension_numbers<[1], [0], [0], [1], [0, 0, 1, 1], [], []>} : vector<4x4xf32>, vector<4x256xf32>, vector<4x256xf32> -> vector<4x256xf32>
    %117 = arith.addf %112, %116 : vector<4x256xf32>
    %c0_113 = arith.constant 0 : index
    %c18_114 = arith.constant 18 : index
    %118 = vector.load %arg9[%c0_113, %c18_114] : memref<4x290xf32, #tpu.memory_space<vmem>>, vector<4x256xf32>
    %c5_115 = arith.constant 5 : index
    %c0_116 = arith.constant 0 : index
    %c0_117 = arith.constant 0 : index
    %119 = vector.load %arg4[%c5_115, %c0_116, %c0_117] : memref<9x4x4xf32, #tpu.memory_space<vmem>>, vector<1x4x4xf32>
    %120 = vector.shape_cast %119 : vector<1x4x4xf32> to vector<4x4xf32>
    %cst_118 = arith.constant dense<0.000000e+00> : vector<4x256xf32>
    %121 = tpu.matmul %120, %118, %cst_118 {dimension_numbers = #tpu.dot_dimension_numbers<[1], [0], [0], [1], [0, 0, 1, 1], [], []>} : vector<4x4xf32>, vector<4x256xf32>, vector<4x256xf32> -> vector<4x256xf32>
    %122 = arith.addf %117, %121 : vector<4x256xf32>
    %c0_119 = arith.constant 0 : index
    %c34_120 = arith.constant 34 : index
    %123 = vector.load %arg9[%c0_119, %c34_120] : memref<4x290xf32, #tpu.memory_space<vmem>>, vector<4x256xf32>
    %c8_121 = arith.constant 8 : index
    %c0_122 = arith.constant 0 : index
    %c0_123 = arith.constant 0 : index
    %124 = vector.load %arg4[%c8_121, %c0_122, %c0_123] : memref<9x4x4xf32, #tpu.memory_space<vmem>>, vector<1x4x4xf32>
    %125 = vector.shape_cast %124 : vector<1x4x4xf32> to vector<4x4xf32>
    %cst_124 = arith.constant dense<0.000000e+00> : vector<4x256xf32>
    %126 = tpu.matmul %125, %123, %cst_124 {dimension_numbers = #tpu.dot_dimension_numbers<[1], [0], [0], [1], [0, 0, 1, 1], [], []>} : vector<4x4xf32>, vector<4x256xf32>, vector<4x256xf32> -> vector<4x256xf32>
    %127 = arith.addf %122, %126 : vector<4x256xf32>
    %128 = vector.broadcast %3 : vector<1x256xf32> to vector<4x256xf32>
    %129 = arith.mulf %127, %128 : vector<4x256xf32>
    %130 = arith.addf %111, %129 : vector<4x256xf32>
    %c0_125 = arith.constant 0 : index
    %c0_126 = arith.constant 0 : index
    %131 = vector.load %arg5[%c0_125, %c0_126] : memref<4x1xf32, #tpu.memory_space<vmem>>, vector<4x1xf32>
    %132 = vector.broadcast %131 : vector<4x1xf32> to vector<4x256xf32>
    %133 = arith.addf %130, %132 : vector<4x256xf32>
    %134 = arith.addf %133, %1 : vector<4x256xf32>
    %cst_127 = arith.constant 0.000000e+00 : f32
    %135 = vector.broadcast %cst_127 : f32 to vector<4x256xf32>
    %136 = arith.maximumf %134, %135 : vector<4x256xf32>
    %c0_128 = arith.constant 0 : index
    %c0_129 = arith.constant 0 : index
    %c0_130 = arith.constant 0 : index
    %137 = vector.load %arg7[%c0_128, %c0_129, %c0_130] : memref<1x4x256xf32, #tpu.memory_space<vmem>>, vector<1x4x256xf32>
    %138 = vector.shape_cast %137 : vector<1x4x256xf32> to vector<4x256xf32>
    %139 = vector.shape_cast %136 : vector<4x256xf32> to vector<1x4x256xf32>
    tpu.vector_store %arg7[%c0_128, %c0_129, %c0_130], %139 {strides = array<i32>} : memref<1x4x256xf32, #tpu.memory_space<vmem>>, vector<1x4x256xf32>,
    return
  }
  func.func @transform_0(%arg0: i32) -> (i32, i32, i32) {
    %c0_i32 = arith.constant 0 : i32
    %c0_i32_0 = arith.constant 0 : i32
    %c0_i32_1 = arith.constant 0 : i32
    return %arg0, %c0_i32, %c0_i32_0 : i32, i32, i32
  }
  func.func @transform_1(%arg0: i32) -> (i32, i32, i32) {
    %c0_i32 = arith.constant 0 : i32
    %c0_i32_0 = arith.constant 0 : i32
    %c0_i32_1 = arith.constant 0 : i32
    %c0_i32_2 = arith.constant 0 : i32
    return %c0_i32, %c0_i32_0, %c0_i32_1 : i32, i32, i32
  }
  func.func @transform_2(%arg0: i32) -> (i32, i32) {
    %c0_i32 = arith.constant 0 : i32
    %c0_i32_0 = arith.constant 0 : i32
    %c0_i32_1 = arith.constant 0 : i32
    return %c0_i32, %c0_i32_0 : i32, i32
  }
  func.func @transform_3(%arg0: i32) -> (i32, i32, i32) {
    %c0_i32 = arith.constant 0 : i32
    %c0_i32_0 = arith.constant 0 : i32
    %c0_i32_1 = arith.constant 0 : i32
    %c0_i32_2 = arith.constant 0 : i32
    return %c0_i32, %c0_i32_0, %c0_i32_1 : i32, i32, i32
  }
  func.func @transform_4(%arg0: i32) -> (i32, i32) {
    %c0_i32 = arith.constant 0 : i32
    %c0_i32_0 = arith.constant 0 : i32
    %c0_i32_1 = arith.constant 0 : i32
    return %c0_i32, %c0_i32_0 : i32, i32
  }
  func.func @transform_5(%arg0: i32) -> (i32, i32) {
    %c0_i32 = arith.constant 0 : i32
    %c0_i32_0 = arith.constant 0 : i32
    %c0_i32_1 = arith.constant 0 : i32
    return %c0_i32, %c0_i32_0 : i32, i32
  }
  func.func @transform_6(%arg0: i32) -> (i32, i32, i32) {
    %c0_i32 = arith.constant 0 : i32
    %c0_i32_0 = arith.constant 0 : i32
    %c0_i32_1 = arith.constant 0 : i32
    return %arg0, %c0_i32, %c0_i32_0 : i32, i32, i32
  }
}

</mosaic_0001>

<llo_original>
// kernel: tpu_custom_call.1
$region0: #{tpu_custom_call.1}
  #allocation0 [shape = 'u32[]', space=smem, size = 0x4, offset = 0x4, fixed_abs, tag = 'smem constant byte address 0x4 - core index']
  #allocation1 [shape = 'u32[144,128]{1,0:T(1,128)}', space=vmem, size = 0x12000, scoped, tag = 'internal scratch']
  #allocation2 [shape = 'f32[4,290]{1,0:T(4,128)}', space=vmem, size = 0x1800, scoped, tag = 'scratch operand']
  #allocation3 [shape = 'f32[4,290]{1,0:T(4,128)}', space=vmem, size = 0x1800, scoped, tag = 'scratch operand']
  %s0 = inlined_call_operand.vmem [shape: f32[2,4,256], index: 0, kind: input, shape index: {}]
  %s1 = inlined_call_operand.vmem [shape: f32[9,4,4], index: 1, kind: input, shape index: {}]
  %s2 = inlined_call_operand.vmem [shape: f32[4,1], index: 2, kind: input, shape index: {}]
  %s3 = inlined_call_operand.vmem [shape: f32[9,4,4], index: 3, kind: input, shape index: {}]
  %s4 = inlined_call_operand.vmem [shape: f32[4,1], index: 4, kind: input, shape index: {}]
  %s5 = inlined_call_operand.vmem [shape: f32[2,256], index: 5, kind: input, shape index: {}]
  %s6 = inlined_call_operand.hbm [shape: f32[2,4,256], index: 6, kind: output, shape index: {}]
  %s7 = sld [smem:[#allocation0]]
  $region57: #{tpu_custom_call.1} parent=0
    _
  %s9 = ssub.s32 1, %s7
  %s10 = scalar_select 0, %s9, %s7
  $region1: #{tpu_custom_call.1} parent=0
    #allocation4 [shape = 'u8[8192]{0}', space=vmem, size = 0x2000, scoped, tag = 'output window, operand 0']
    #allocation5 [shape = 's32[2]{0}', space=sflag, size = 0x8, scoped, tag = 'scoped memory for tpu_custom_call.1']
    %11 = vsyncpa [#allocation5], 0
    %s12 = scalar_lea.sflag [#allocation5], 1
    %13 = vsyncpa %s12, 0
    loop: start=0, step=1, limit=4
    $region2: #{tpu_custom_call.1} parent=1 // loop_pre_header
      _
    $region3: #{tpu_custom_call.1} parent=1 // loop_header
      %s15 = sphi 0, %s19
      %p16 = scmp.ge.s32.totalorder %s15, 4
      %s25 = sphi 0, %s27
      %s28 = sphi 0, %s25
      %s29 = sphi 0, %s28
      %s45 = sphi 0, %s29
      %s49 = sphi 0, %s49
      %s51 = sphi 0, %s49
      %s52 = sphi 0, %s51
      %s66 = sphi 0, %s52
      %s70 = sphi 0, %s70
      %s72 = sphi 0, %s70
      %s73 = sphi 0, %s72
      %s87 = sphi 0, %s73
      %s91 = sphi 0, %s91
      %s93 = sphi 0, %s91
      %s94 = sphi 0, %s93
      %s108 = sphi 0, %s94
      %s112 = sphi 0, %s112
      %s114 = sphi 0, %s112
      %s115 = sphi 0, %s114
      %s129 = sphi 0, %s115
      %s133 = sphi 0, %s133
      %s135 = sphi 0, %s133
      %s136 = sphi 0, %s135
      %s150 = sphi 0, %s136
      %s156 = sphi 0, %s158
      %s159 = sphi 0, %s156
      %s160 = sphi 0, %s159
      %s176 = sphi 0, %s160
    $region4: #{tpu_custom_call.1} parent=1 // loop_header_branch
      %18 = sbr.rel (%p16) target = $region8
    $region5: #{tpu_custom_call.1} parent=1 // loop_body
      %s20 = ssub.s32 %s15, 1
      %s21 = ssub.s32 %s15, 2
      %s22 = sadd.s32 %s15, 1
      %s23 = ssub.s32 %s15, %s22
      %p24 = scmp.eq.s32.totalorder %s23, 0
      %s26 = sadd.s32 %s25, 1
      %s27 = scalar_select %p24, %s25, %s26
      %p30 = pneg %p24
      %p31 = scmp.eq.s32.totalorder %s15, 1
      %p32 = por %p30, %p31
      %p33 = scmp.ne.s32.totalorder %s25, %s28
      %p34 = scmp.eq.s32.totalorder %s15, 0
      %p35 = por %p33, %p34
      %p36 = scmp.ne.s32.totalorder %s25, %s28
      %p37 = scmp.eq.s32.totalorder %s20, 1
      %p38 = por %p36, %p37
      %p39 = scmp.ne.s32.totalorder %s28, %s29
      %p40 = scmp.eq.s32.totalorder %s20, 0
      %p41 = por %p39, %p40
      %p42 = scmp.ne.s32.totalorder %s28, %s29
      %p43 = scmp.eq.s32.totalorder %s21, 1
      %p44 = por %p42, %p43
      %p46 = scmp.ne.s32.totalorder %s29, %s45
      %p47 = scmp.eq.s32.totalorder %s21, 0
      %p48 = por %p46, %p47
      %s50 = sadd.s32 %s49, 1
      %p53 = scmp.eq.s32.totalorder %s15, 1
      %p54 = scmp.ne.s32.totalorder %s49, %s51
      %p55 = scmp.eq.s32.totalorder %s15, 0
      %p56 = por %p54, %p55
      %p57 = scmp.ne.s32.totalorder %s49, %s51
      %p58 = scmp.eq.s32.totalorder %s20, 1
      %p59 = por %p57, %p58
      %p60 = scmp.ne.s32.totalorder %s51, %s52
      %p61 = scmp.eq.s32.totalorder %s20, 0
      %p62 = por %p60, %p61
      %p63 = scmp.ne.s32.totalorder %s51, %s52
      %p64 = scmp.eq.s32.totalorder %s21, 1
      %p65 = por %p63, %p64
      %p67 = scmp.ne.s32.totalorder %s52, %s66
      %p68 = scmp.eq.s32.totalorder %s21, 0
      %p69 = por %p67, %p68
      %s71 = sadd.s32 %s70, 1
      %p74 = scmp.eq.s32.totalorder %s15, 1
      %p75 = scmp.ne.s32.totalorder %s70, %s72
      %p76 = scmp.eq.s32.totalorder %s15, 0
      %p77 = por %p75, %p76
      %p78 = scmp.ne.s32.totalorder %s70, %s72
      %p79 = scmp.eq.s32.totalorder %s20, 1
      %p80 = por %p78, %p79
      %p81 = scmp.ne.s32.totalorder %s72, %s73
      %p82 = scmp.eq.s32.totalorder %s20, 0
      %p83 = por %p81, %p82
      %p84 = scmp.ne.s32.totalorder %s72, %s73
      %p85 = scmp.eq.s32.totalorder %s21, 1
      %p86 = por %p84, %p85
      %p88 = scmp.ne.s32.totalorder %s73, %s87
      %p89 = scmp.eq.s32.totalorder %s21, 0
      %p90 = por %p88, %p89
      %s92 = sadd.s32 %s91, 1
      %p95 = scmp.eq.s32.totalorder %s15, 1
      %p96 = scmp.ne.s32.totalorder %s91, %s93
      %p97 = scmp.eq.s32.totalorder %s15, 0
      %p98 = por %p96, %p97
      %p99 = scmp.ne.s32.totalorder %s91, %s93
      %p100 = scmp.eq.s32.totalorder %s20, 1
      %p101 = por %p99, %p100
      %p102 = scmp.ne.s32.totalorder %s93, %s94
      %p103 = scmp.eq.s32.totalorder %s20, 0
      %p104 = por %p102, %p103
      %p105 = scmp.ne.s32.totalorder %s93, %s94
      %p106 = scmp.eq.s32.totalorder %s21, 1
      %p107 = por %p105, %p106
      %p109 = scmp.ne.s32.totalorder %s94, %s108
      %p110 = scmp.eq.s32.totalorder %s21, 0
      %p111 = por %p109, %p110
      %s113 = sadd.s32 %s112, 1
      %p116 = scmp.eq.s32.totalorder %s15, 1
      %p117 = scmp.ne.s32.totalorder %s112, %s114
      %p118 = scmp.eq.s32.totalorder %s15, 0
      %p119 = por %p117, %p118
      %p120 = scmp.ne.s32.totalorder %s112, %s114
      %p121 = scmp.eq.s32.totalorder %s20, 1
      %p122 = por %p120, %p121
      %p123 = scmp.ne.s32.totalorder %s114, %s115
      %p124 = scmp.eq.s32.totalorder %s20, 0
      %p125 = por %p123, %p124
      %p126 = scmp.ne.s32.totalorder %s114, %s115
      %p127 = scmp.eq.s32.totalorder %s21, 1
      %p128 = por %p126, %p127
      %p130 = scmp.ne.s32.totalorder %s115, %s129
      %p131 = scmp.eq.s32.totalorder %s21, 0
      %p132 = por %p130, %p131
      %s134 = sadd.s32 %s133, 1
      %p137 = scmp.eq.s32.totalorder %s15, 1
      %p138 = scmp.ne.s32.totalorder %s133, %s135
      %p139 = scmp.eq.s32.totalorder %s15, 0
      %p140 = por %p138, %p139
      %p141 = scmp.ne.s32.totalorder %s133, %s135
      %p142 = scmp.eq.s32.totalorder %s20, 1
      %p143 = por %p141, %p142
      %p144 = scmp.ne.s32.totalorder %s135, %s136
      %p145 = scmp.eq.s32.totalorder %s20, 0
      %p146 = por %p144, %p145
      %p147 = scmp.ne.s32.totalorder %s135, %s136
      %p148 = scmp.eq.s32.totalorder %s21, 1
      %p149 = por %p147, %p148
      %p151 = scmp.ne.s32.totalorder %s136, %s150
      %p152 = scmp.eq.s32.totalorder %s21, 0
      %p153 = por %p151, %p152
      %s154 = ssub.s32 %s15, %s22
      %p155 = scmp.eq.s32.totalorder %s154, 0
      %s157 = sadd.s32 %s156, 1
      %s158 = scalar_select %p155, %s156, %s157
      %p161 = pneg %p155
      %p162 = scmp.eq.s32.totalorder %s15, 1
      %p163 = por %p161, %p162
      %p164 = scmp.ne.s32.totalorder %s156, %s159
      %p165 = scmp.eq.s32.totalorder %s15, 0
      %p166 = por %p164, %p165
      %p167 = scmp.ne.s32.totalorder %s156, %s159
      %p168 = scmp.eq.s32.totalorder %s20, 1
      %p169 = por %p167, %p168
      %p170 = scmp.ne.s32.totalorder %s159, %s160
      %p171 = scmp.eq.s32.totalorder %s20, 0
      %p172 = por %p170, %p171
      %p173 = scmp.ne.s32.totalorder %s159, %s160
      %p174 = scmp.eq.s32.totalorder %s21, 1
      %p175 = por %p173, %p174
      %p177 = scmp.ne.s32.totalorder %s160, %s176
      %p178 = scmp.eq.s32.totalorder %s21, 0
      %p179 = por %p177, %p178
      %p180 = scmp.le.s32.totalorder 1, %s15
      %p181 = scmp.lt.s32.totalorder %s15, 3
      %p182 = pnand %p180, %p181
      %p183 = pneg %p182
      // Predicated region
      $region9: #{tpu_custom_call.1} parent=5 // pred_check
        _
      $region10: #{tpu_custom_call.1} parent=5 // pred_check_branch
        %185 = sbr.rel (%p182) target = $region12
      $region11: #{tpu_custom_call.1} parent=5 // pred_region
        %s186 = ssub.s32 %s15, 1
        // Predicated region
        $region13: #{tpu_custom_call.1} parent=11 // pred_check
          %p187 = pneg %p62
        $region14: #{tpu_custom_call.1} parent=11 // pred_check_branch
          %189 = sbr.rel (%p187) target = $region16
        $region15: #{tpu_custom_call.1} parent=11 // pred_region
          _
        $region16: #{tpu_custom_call.1} parent=11 // pred_fallthru
          _
        // Predicated region
        $region17: #{tpu_custom_call.1} parent=11 // pred_check
          %p190 = pneg %p83
        $region18: #{tpu_custom_call.1} parent=11 // pred_check_branch
          %192 = sbr.rel (%p190) target = $region20
        $region19: #{tpu_custom_call.1} parent=11 // pred_region
          _
        $region20: #{tpu_custom_call.1} parent=11 // pred_fallthru
          _
        // Predicated region
        $region21: #{tpu_custom_call.1} parent=11 // pred_check
          %p193 = pneg %p104
        $region22: #{tpu_custom_call.1} parent=11 // pred_check_branch
          %195 = sbr.rel (%p193) target = $region24
        $region23: #{tpu_custom_call.1} parent=11 // pred_region
          _
        $region24: #{tpu_custom_call.1} parent=11 // pred_fallthru
          _
        // Predicated region
        $region25: #{tpu_custom_call.1} parent=11 // pred_check
          %p196 = pneg %p125
        $region26: #{tpu_custom_call.1} parent=11 // pred_check_branch
          %198 = sbr.rel (%p196) target = $region28
        $region27: #{tpu_custom_call.1} parent=11 // pred_region
          _
        $region28: #{tpu_custom_call.1} parent=11 // pred_fallthru
          _
        // Predicated region
        $region29: #{tpu_custom_call.1} parent=11 // pred_check
          %p199 = pneg %p146
        $region30: #{tpu_custom_call.1} parent=11 // pred_check_branch
          %201 = sbr.rel (%p199) target = $region32
        $region31: #{tpu_custom_call.1} parent=11 // pred_region
          _
        $region32: #{tpu_custom_call.1} parent=11 // pred_fallthru
          _
      $region12: #{tpu_custom_call.1} parent=5 // pred_fallthru
        _
      %p202 = scmp.lt.s32.totalorder %s15, 2
      // Predicated region
      $region33: #{tpu_custom_call.1} parent=5 // pred_check
        %p203 = pneg %p202
      $region34: #{tpu_custom_call.1} parent=5 // pred_check_branch
        %205 = sbr.rel (%p203) target = $region36
      $region35: #{tpu_custom_call.1} parent=5 // pred_region
        // Predicated region
        $region37: #{tpu_custom_call.1} parent=35 // pred_check
          %p206 = pneg %p35
        $region38: #{tpu_custom_call.1} parent=35 // pred_check_branch
          %208 = sbr.rel (%p206) target = $region40
        $region39: #{tpu_custom_call.1} parent=35 // pred_region
          %p209 = scmp.lt.s32.totalorder %s15, 1
          %s210 = scalar_select %p209, %s15, 1
          %s211 = smul.addr %s210, 2
          %s212 = smul.addr %s211, 4
          %s213 = scalar_lea.vmem %s0, %s212
        $region40: #{tpu_custom_call.1} parent=35 // pred_fallthru
          _
      $region36: #{tpu_custom_call.1} parent=5 // pred_fallthru
        _
      %p214 = scmp.le.s32.totalorder 1, %s15
      %p215 = scmp.lt.s32.totalorder %s15, 3
      %p216 = pnand %p214, %p215
      %p217 = pneg %p216
      // Predicated region
      $region41: #{tpu_custom_call.1} parent=5 // pred_check
        _
      $region42: #{tpu_custom_call.1} parent=5 // pred_check_branch
        %219 = sbr.rel (%p216) target = $region44
      $region43: #{tpu_custom_call.1} parent=5 // pred_region
        %s220 = ssub.s32 %s15, 1
        %p221 = scmp.lt.s32.totalorder %s20, 1
        %s222 = scalar_select %p221, %s20, 1
        %s223 = smul.addr %s222, 2
        %s224 = smul.addr %s223, 4
        %s225 = scalar_lea.vmem %s0, %s224
        %p226 = pneg %p41
        %p227 = pneg %p38
        %p228 = pneg %p62
        %p229 = pneg %p59
        %p230 = pneg %p83
        %p231 = pneg %p80
        %p232 = pneg %p104
        %p233 = pneg %p101
        %p234 = pneg %p125
        %p235 = pneg %p122
        %p236 = pneg %p146
        %p237 = pneg %p143
        %p238 = pneg %p172
        %p239 = pneg %p169
        %s240 = sand.u32 %s159, 1
        %s241 = scalar_lea.sflag [#allocation5], %s240
        %s242 = sand.u32 %s159, 1
        %s243 = smul.addr %s242, 8
        %s244 = scalar_lea.vmem [#allocation4], %s243
        %p245 = scmp.lt.s32.totalorder %s20, 1
        %s246 = scalar_select %p245, %s20, 1
        %s247 = smul.addr %s246, 2
        %s248 = smul.addr %s247, 4
        %s249 = scalar_lea.vmem %s0, %s248
        %v250 = vld [vmem:[%s249] sm:$0xff]
        %v251 = vld [vmem:[%s5] ss:$2 sm:$0x3]
        %s252 = scalar_lea.vmem %s5, 1
        %v253 = vld [vmem:[%s252] ss:$2 sm:$0x3]
        %vm254 = vcmask 134144
        %255 = vst.msk [vmem:[#allocation2] sm:$0xf] %vm254, 0.0
        %vm256 = vcmask 273544
        %257 = vst.msk [vmem:[#allocation2 + $0x8] sm:$0xf] %vm256, 0.0
        %259 = vrot.lane.b32.xlu0 %v250, 17
        %v260 = vpop.permute.xlu0 %259
        %v261 = vrot.slane %v260, 4
        %vm262 = vcmask 138240
        %v263 = vsel %vm262, %v261, %v260
        %vm266 = vcmask 1043592
        %vm267 = vcmask 1047556
        %vm268 = vmor %vm267, %vm266
        %269 = vst.msk [vmem:[#allocation2] sm:$0xff] %vm268, %v263
        %270 = vst.msk [vmem:[#allocation2 + $0x8] sm:$0xf] %vm254, %v261
        %271 = vst.msk [vmem:[#allocation3] sm:$0xf] %vm254, 0.0
        %272 = vst.msk [vmem:[#allocation3 + $0x8] sm:$0xf] %vm256, 0.0
        %v273 = vld [vmem:[#allocation2] sm:$0xff]
        %v274 = vld [vmem:[%s1] sm:$0xf]
        %v275 = vld [vmem:[#allocation2 + $0x8] sm:$0xf]
        %s276 = scalar_lea.vmem %s1, 12
        %v277 = vld [vmem:[%s276] sm:$0xf]
        %v280 = vcombine.high %v273, %v273
        %281 = vrot.lane.b32.xlu0 %v273, 112
        %v282 = vpop.permute.xlu0 %281
        %283 = vrot.lane.b32.xlu0 %v280, 112
        %v284 = vpop.permute.xlu0 %283
        %285 = vrot.lane.b32.xlu0 %v275, 112
        %v286 = vpop.permute.xlu0 %285
        %vm287 = vcmask 916480
        %v288 = vsel %vm287, %v282, %v284
        %v289 = vsel %vm287, %v284, %v286
        %vm290 = vcmask 31744
        %v292 = vsel %vm290, %v277, 0
        %vm294 = vcmask 1043456
        %v295 = vsel %vm294, %v288, 0
        %v297 = vsel %vm294, %v289, 0
        %299 = vmatprep.subr.mxu0 %v297
        %300 = vmatpush1.msra.mxu0 %v295
        %301 = vmatprep.subr.mxu0 0.0
        %302 = vmatpush1.msra.mxu0 0.0
        %303 = vmatprep.subr.mxu0 0.0
        %304 = vmatpush1.msra.mxu0 0.0
        %305 = vmatprep.subr.mxu0 0.0
        %306 = vmatpush1.msra.mxu0 0.0
        %307 = vmatprep.subr.mxu0 0.0
        %308 = vmatpush1.msra.mxu0 0.0
        %309 = vmatprep.subr.mxu0 0.0
        %310 = vmatpush1.msra.mxu0 0.0
        %311 = vmatprep.subr.mxu0 0.0
        %312 = vmatpush1.msra.mxu0 0.0
        %313 = vmatprep.subr.mxu0 0.0
        %314 = vmatpush1.msra.mxu0 0.0
        %315 = vmatprep.subr.mxu0 0.0
        %316 = vmatpush1.msra.mxu0 0.0
        %317 = vmatprep.subr.mxu0 0.0
        %318 = vmatpush1.msra.mxu0 0.0
        %319 = vmatprep.subr.mxu0 0.0
        %320 = vmatpush1.msra.mxu0 0.0
        %321 = vmatprep.subr.mxu0 0.0
        %322 = vmatpush1.msra.mxu0 0.0
        %323 = vmatprep.subr.mxu0 0.0
        %324 = vmatpush1.msra.mxu0 0.0
        %325 = vmatprep.subr.mxu0 0.0
        %326 = vmatpush1.msra.mxu0 0.0
        %327 = vmatprep.subr.mxu0 0.0
        %328 = vmatpush1.msra.mxu0 0.0
        %329 = vmatprep.subr.mxu0 0.0
        %330 = vmatpush1.msra.mxu0 0.0
        %331 = vmatprep.subr.mxu0 0.0
        %332 = vmatpush1.msra.mxu0 0.0
        %333 = vmatprep.subr.mxu0 0.0
        %334 = vmatpush1.msra.mxu0 0.0
        %335 = vmatprep.subr.mxu0 0.0
        %336 = vmatpush1.msra.mxu0 0.0
        %337 = vmatprep.subr.mxu0 0.0
        %338 = vmatpush1.msra.mxu0 0.0
        %339 = vmatprep.subr.mxu0 0.0
        %340 = vmatpush1.msra.mxu0 0.0
        %341 = vmatprep.subr.mxu0 0.0
        %342 = vmatpush1.msra.mxu0 0.0
        %343 = vmatprep.subr.mxu0 0.0
        %344 = vmatpush1.msra.mxu0 0.0
        %345 = vmatprep.subr.mxu0 0.0
        %346 = vmatpush1.msra.mxu0 0.0
        %347 = vmatprep.subr.mxu0 0.0
        %348 = vmatpush1.msra.mxu0 0.0
        %349 = vmatprep.subr.mxu0 0.0
        %350 = vmatpush1.msra.mxu0 0.0
        %351 = vmatprep.subr.mxu0 0.0
        %352 = vmatpush1.msra.mxu0 0.0
        %353 = vmatprep.subr.mxu0 0.0
        %354 = vmatpush1.msra.mxu0 0.0
        %355 = vmatprep.subr.mxu0 0.0
        %356 = vmatpush1.msra.mxu0 0.0
        %357 = vmatprep.subr.mxu0 0.0
        %358 = vmatpush1.msra.mxu0 0.0
        %359 = vmatprep.subr.mxu0 0.0
        %360 = vmatpush1.msra.mxu0 0.0
        %361 = vmatprep.subr.mxu0 0.0
        %362 = vmatpush1.msra.mxu0 0.0
        %363 = vmatprep.mubr.f32.mxu0 0.0
        %364 = vmatmul.mubr.f32.gmra.mrb[0].mxu0 %v292
        %v365 = vpop.f32.mrb[0].mxu0
        %v366 = vadd.f32 0.0, %v365
        %v367 = vpop.f32.mrb[0].mxu0
        %v368 = vadd.f32 0.0, %v367
        %369 = vdwg.mxu0
        %v371 = vsel %vm290, %v274, 0
        %v373 = vsel %vm294, %v273, 0
        %v375 = vsel %vm294, %v280, 0
        %377 = vmatprep.subr.mxu0 %v375
        %378 = vmatpush1.msra.mxu0 %v373
        %379 = vmatprep.subr.mxu0 0.0
        %380 = vmatpush1.msra.mxu0 0.0
        %381 = vmatprep.subr.mxu0 0.0
        %382 = vmatpush1.msra.mxu0 0.0
        %383 = vmatprep.subr.mxu0 0.0
        %384 = vmatpush1.msra.mxu0 0.0
        %385 = vmatprep.subr.mxu0 0.0
        %386 = vmatpush1.msra.mxu0 0.0
        %387 = vmatprep.subr.mxu0 0.0
        %388 = vmatpush1.msra.mxu0 0.0
        %389 = vmatprep.subr.mxu0 0.0
        %390 = vmatpush1.msra.mxu0 0.0
        %391 = vmatprep.subr.mxu0 0.0
        %392 = vmatpush1.msra.mxu0 0.0
        %393 = vmatprep.subr.mxu0 0.0
        %394 = vmatpush1.msra.mxu0 0.0
        %395 = vmatprep.subr.mxu0 0.0
        %396 = vmatpush1.msra.mxu0 0.0
        %397 = vmatprep.subr.mxu0 0.0
        %398 = vmatpush1.msra.mxu0 0.0
        %399 = vmatprep.subr.mxu0 0.0
        %400 = vmatpush1.msra.mxu0 0.0
        %401 = vmatprep.subr.mxu0 0.0
        %402 = vmatpush1.msra.mxu0 0.0
        %403 = vmatprep.subr.mxu0 0.0
        %404 = vmatpush1.msra.mxu0 0.0
        %405 = vmatprep.subr.mxu0 0.0
        %406 = vmatpush1.msra.mxu0 0.0
        %407 = vmatprep.subr.mxu0 0.0
        %408 = vmatpush1.msra.mxu0 0.0
        %409 = vmatprep.subr.mxu0 0.0
        %410 = vmatpush1.msra.mxu0 0.0
        %411 = vmatprep.subr.mxu0 0.0
        %412 = vmatpush1.msra.mxu0 0.0
        %413 = vmatprep.subr.mxu0 0.0
        %414 = vmatpush1.msra.mxu0 0.0
        %415 = vmatprep.subr.mxu0 0.0
        %416 = vmatpush1.msra.mxu0 0.0
        %417 = vmatprep.subr.mxu0 0.0
        %418 = vmatpush1.msra.mxu0 0.0
        %419 = vmatprep.subr.mxu0 0.0
        %420 = vmatpush1.msra.mxu0 0.0
        %421 = vmatprep.subr.mxu0 0.0
        %422 = vmatpush1.msra.mxu0 0.0
        %423 = vmatprep.subr.mxu0 0.0
        %424 = vmatpush1.msra.mxu0 0.0
        %425 = vmatprep.subr.mxu0 0.0
        %426 = vmatpush1.msra.mxu0 0.0
        %427 = vmatprep.subr.mxu0 0.0
        %428 = vmatpush1.msra.mxu0 0.0
        %429 = vmatprep.subr.mxu0 0.0
        %430 = vmatpush1.msra.mxu0 0.0
        %431 = vmatprep.subr.mxu0 0.0
        %432 = vmatpush1.msra.mxu0 0.0
        %433 = vmatprep.subr.mxu0 0.0
        %434 = vmatpush1.msra.mxu0 0.0
        %435 = vmatprep.subr.mxu0 0.0
        %436 = vmatpush1.msra.mxu0 0.0
        %437 = vmatprep.subr.mxu0 0.0
        %438 = vmatpush1.msra.mxu0 0.0
        %439 = vmatprep.subr.mxu0 0.0
        %440 = vmatpush1.msra.mxu0 0.0
        %441 = vmatprep.mubr.f32.mxu0 0.0
        %442 = vmatmul.mubr.f32.gmra.mrb[0].mxu0 %v371
        %v443 = vpop.f32.mrb[0].mxu0
        %v444 = vadd.f32 %v366, %v443
        %v445 = vpop.f32.mrb[0].mxu0
        %v446 = vadd.f32 %v368, %v445
        %447 = vdwg.mxu0
        %v448 = vld [vmem:[#allocation2] sm:$0xff]
        %v449 = vld [vmem:[#allocation2 + $0x8] sm:$0xf]
        %s450 = scalar_lea.vmem %s1, 24
        %v451 = vld [vmem:[%s450] sm:$0xf]
        %v454 = vcombine.high %v448, %v448
        %455 = vrot.lane.b32.xlu0 %v448, 96
        %v456 = vpop.permute.xlu0 %455
        %457 = vrot.lane.b32.xlu0 %v454, 96
        %v458 = vpop.permute.xlu0 %457
        %459 = vrot.lane.b32.xlu0 %v449, 96
        %v460 = vpop.permute.xlu0 %459
        %vm461 = vcmask 785408
        %v462 = vsel %vm461, %v456, %v458
        %v463 = vsel %vm461, %v458, %v460
        %v465 = vsel %vm290, %v451, 0
        %v467 = vsel %vm294, %v462, 0
        %v469 = vsel %vm294, %v463, 0
        %471 = vmatprep.subr.mxu0 %v469
        %472 = vmatpush1.msra.mxu0 %v467
        %473 = vmatprep.subr.mxu0 0.0
        %474 = vmatpush1.msra.mxu0 0.0
        %475 = vmatprep.subr.mxu0 0.0
        %476 = vmatpush1.msra.mxu0 0.0
        %477 = vmatprep.subr.mxu0 0.0
        %478 = vmatpush1.msra.mxu0 0.0
        %479 = vmatprep.subr.mxu0 0.0
        %480 = vmatpush1.msra.mxu0 0.0
        %481 = vmatprep.subr.mxu0 0.0
        %482 = vmatpush1.msra.mxu0 0.0
        %483 = vmatprep.subr.mxu0 0.0
        %484 = vmatpush1.msra.mxu0 0.0
        %485 = vmatprep.subr.mxu0 0.0
        %486 = vmatpush1.msra.mxu0 0.0
        %487 = vmatprep.subr.mxu0 0.0
        %488 = vmatpush1.msra.mxu0 0.0
        %489 = vmatprep.subr.mxu0 0.0
        %490 = vmatpush1.msra.mxu0 0.0
        %491 = vmatprep.subr.mxu0 0.0
        %492 = vmatpush1.msra.mxu0 0.0
        %493 = vmatprep.subr.mxu0 0.0
        %494 = vmatpush1.msra.mxu0 0.0
        %495 = vmatprep.subr.mxu0 0.0
        %496 = vmatpush1.msra.mxu0 0.0
        %497 = vmatprep.subr.mxu0 0.0
        %498 = vmatpush1.msra.mxu0 0.0
        %499 = vmatprep.subr.mxu0 0.0
        %500 = vmatpush1.msra.mxu0 0.0
        %501 = vmatprep.subr.mxu0 0.0
        %502 = vmatpush1.msra.mxu0 0.0
        %503 = vmatprep.subr.mxu0 0.0
        %504 = vmatpush1.msra.mxu0 0.0
        %505 = vmatprep.subr.mxu0 0.0
        %506 = vmatpush1.msra.mxu0 0.0
        %507 = vmatprep.subr.mxu0 0.0
        %508 = vmatpush1.msra.mxu0 0.0
        %509 = vmatprep.subr.mxu0 0.0
        %510 = vmatpush1.msra.mxu0 0.0
        %511 = vmatprep.subr.mxu0 0.0
        %512 = vmatpush1.msra.mxu0 0.0
        %513 = vmatprep.subr.mxu0 0.0
        %514 = vmatpush1.msra.mxu0 0.0
        %515 = vmatprep.subr.mxu0 0.0
        %516 = vmatpush1.msra.mxu0 0.0
        %517 = vmatprep.subr.mxu0 0.0
        %518 = vmatpush1.msra.mxu0 0.0
        %519 = vmatprep.subr.mxu0 0.0
        %520 = vmatpush1.msra.mxu0 0.0
        %521 = vmatprep.subr.mxu0 0.0
        %522 = vmatpush1.msra.mxu0 0.0
        %523 = vmatprep.subr.mxu0 0.0
        %524 = vmatpush1.msra.mxu0 0.0
        %525 = vmatprep.subr.mxu0 0.0
        %526 = vmatpush1.msra.mxu0 0.0
        %527 = vmatprep.subr.mxu0 0.0
        %528 = vmatpush1.msra.mxu0 0.0
        %529 = vmatprep.subr.mxu0 0.0
        %530 = vmatpush1.msra.mxu0 0.0
        %531 = vmatprep.subr.mxu0 0.0
        %532 = vmatpush1.msra.mxu0 0.0
        %533 = vmatprep.subr.mxu0 0.0
        %534 = vmatpush1.msra.mxu0 0.0
        %535 = vmatprep.mubr.f32.mxu0 0.0
        %536 = vmatmul.mubr.f32.gmra.mrb[0].mxu0 %v465
        %v537 = vpop.f32.mrb[0].mxu0
        %v538 = vadd.f32 0.0, %v537
        %v539 = vpop.f32.mrb[0].mxu0
        %v540 = vadd.f32 0.0, %v539
        %541 = vdwg.mxu0
        %v542 = vadd.f32 %v444, %v538
        %v543 = vadd.f32 %v446, %v540
        %v545 = vlaneseq
        %v546 = vshrl.u32 %v545, 7
        %v547 = vsub.s32 0, %v546
        %v548 = vrot.slane %v251, %v547
        %v549 = vlaneseq
        %v550 = vshrl.u32 %v549, 7
        %v551 = vsub.s32 1, %v550
        %v552 = vrot.slane %v251, %v551
        %v555 = vmul.f32 %v542, %v548
        %v556 = vmul.f32 %v543, %v552
        %v557 = vadd.f32 %v555, 0.0
        %v558 = vadd.f32 %v556, 0.0
        %v559 = vld [vmem:[#allocation2] sm:$0xff]
        %v560 = vld [vmem:[#allocation2 + $0x8] sm:$0xf]
        %s561 = scalar_lea.vmem %s1, 4
        %v562 = vld [vmem:[%s561] sm:$0xf]
        %s563 = scalar_lea.vmem %s1, 16
        %v564 = vld [vmem:[%s563] sm:$0xf]
        %v567 = vcombine.high %v559, %v559
        %568 = vrot.lane.b32.xlu0 %v559, 111
        %v569 = vpop.permute.xlu0 %568
        %570 = vrot.lane.b32.xlu0 %v567, 111
        %v571 = vpop.permute.xlu0 %570
        %572 = vrot.lane.b32.xlu0 %v560, 111
        %v573 = vpop.permute.xlu0 %572
        %vm574 = vcmask 908288
        %v575 = vsel %vm574, %v569, %v571
        %v576 = vsel %vm574, %v571, %v573
        %v578 = vsel %vm290, %v564, 0
        %v580 = vsel %vm294, %v575, 0
        %v582 = vsel %vm294, %v576, 0
        %584 = vmatprep.subr.mxu0 %v582
        %585 = vmatpush1.msra.mxu0 %v580
        %586 = vmatprep.subr.mxu0 0.0
        %587 = vmatpush1.msra.mxu0 0.0
        %588 = vmatprep.subr.mxu0 0.0
        %589 = vmatpush1.msra.mxu0 0.0
        %590 = vmatprep.subr.mxu0 0.0
        %591 = vmatpush1.msra.mxu0 0.0
        %592 = vmatprep.subr.mxu0 0.0
        %593 = vmatpush1.msra.mxu0 0.0
        %594 = vmatprep.subr.mxu0 0.0
        %595 = vmatpush1.msra.mxu0 0.0
        %596 = vmatprep.subr.mxu0 0.0
        %597 = vmatpush1.msra.mxu0 0.0
        %598 = vmatprep.subr.mxu0 0.0
        %599 = vmatpush1.msra.mxu0 0.0
        %600 = vmatprep.subr.mxu0 0.0
        %601 = vmatpush1.msra.mxu0 0.0
        %602 = vmatprep.subr.mxu0 0.0
        %603 = vmatpush1.msra.mxu0 0.0
        %604 = vmatprep.subr.mxu0 0.0
        %605 = vmatpush1.msra.mxu0 0.0
        %606 = vmatprep.subr.mxu0 0.0
        %607 = vmatpush1.msra.mxu0 0.0
        %608 = vmatprep.subr.mxu0 0.0
        %609 = vmatpush1.msra.mxu0 0.0
        %610 = vmatprep.subr.mxu0 0.0
        %611 = vmatpush1.msra.mxu0 0.0
        %612 = vmatprep.subr.mxu0 0.0
        %613 = vmatpush1.msra.mxu0 0.0
        %614 = vmatprep.subr.mxu0 0.0
        %615 = vmatpush1.msra.mxu0 0.0
        %616 = vmatprep.subr.mxu0 0.0
        %617 = vmatpush1.msra.mxu0 0.0
        %618 = vmatprep.subr.mxu0 0.0
        %619 = vmatpush1.msra.mxu0 0.0
        %620 = vmatprep.subr.mxu0 0.0
        %621 = vmatpush1.msra.mxu0 0.0
        %622 = vmatprep.subr.mxu0 0.0
        %623 = vmatpush1.msra.mxu0 0.0
        %624 = vmatprep.subr.mxu0 0.0
        %625 = vmatpush1.msra.mxu0 0.0
        %626 = vmatprep.subr.mxu0 0.0
        %627 = vmatpush1.msra.mxu0 0.0
        %628 = vmatprep.subr.mxu0 0.0
        %629 = vmatpush1.msra.mxu0 0.0
        %630 = vmatprep.subr.mxu0 0.0
        %631 = vmatpush1.msra.mxu0 0.0
        %632 = vmatprep.subr.mxu0 0.0
        %633 = vmatpush1.msra.mxu0 0.0
        %634 = vmatprep.subr.mxu0 0.0
        %635 = vmatpush1.msra.mxu0 0.0
        %636 = vmatprep.subr.mxu0 0.0
        %637 = vmatpush1.msra.mxu0 0.0
        %638 = vmatprep.subr.mxu0 0.0
        %639 = vmatpush1.msra.mxu0 0.0
        %640 = vmatprep.subr.mxu0 0.0
        %641 = vmatpush1.msra.mxu0 0.0
        %642 = vmatprep.subr.mxu0 0.0
        %643 = vmatpush1.msra.mxu0 0.0
        %644 = vmatprep.subr.mxu0 0.0
        %645 = vmatpush1.msra.mxu0 0.0
        %646 = vmatprep.subr.mxu0 0.0
        %647 = vmatpush1.msra.mxu0 0.0
        %648 = vmatprep.mubr.f32.mxu0 0.0
        %649 = vmatmul.mubr.f32.gmra.mrb[0].mxu0 %v578
        %v650 = vpop.f32.mrb[0].mxu0
        %v651 = vadd.f32 0.0, %v650
        %v652 = vpop.f32.mrb[0].mxu0
        %v653 = vadd.f32 0.0, %v652
        %654 = vdwg.mxu0
        %655 = vrot.lane.b32.xlu0 %v559, 127
        %v656 = vpop.permute.xlu0 %655
        %657 = vrot.lane.b32.xlu0 %v567, 127
        %v658 = vpop.permute.xlu0 %657
        %659 = vrot.lane.b32.xlu0 %v560, 127
        %v660 = vpop.permute.xlu0 %659
        %vm661 = vcmask 1039360
        %v662 = vsel %vm661, %v656, %v658
        %v663 = vsel %vm661, %v658, %v660
        %v665 = vsel %vm290, %v562, 0
        %v667 = vsel %vm294, %v662, 0
        %v669 = vsel %vm294, %v663, 0
        %671 = vmatprep.subr.mxu0 %v669
        %672 = vmatpush1.msra.mxu0 %v667
        %673 = vmatprep.subr.mxu0 0.0
        %674 = vmatpush1.msra.mxu0 0.0
        %675 = vmatprep.subr.mxu0 0.0
        %676 = vmatpush1.msra.mxu0 0.0
        %677 = vmatprep.subr.mxu0 0.0
        %678 = vmatpush1.msra.mxu0 0.0
        %679 = vmatprep.subr.mxu0 0.0
        %680 = vmatpush1.msra.mxu0 0.0
        %681 = vmatprep.subr.mxu0 0.0
        %682 = vmatpush1.msra.mxu0 0.0
        %683 = vmatprep.subr.mxu0 0.0
        %684 = vmatpush1.msra.mxu0 0.0
        %685 = vmatprep.subr.mxu0 0.0
        %686 = vmatpush1.msra.mxu0 0.0
        %687 = vmatprep.subr.mxu0 0.0
        %688 = vmatpush1.msra.mxu0 0.0
        %689 = vmatprep.subr.mxu0 0.0
        %690 = vmatpush1.msra.mxu0 0.0
        %691 = vmatprep.subr.mxu0 0.0
        %692 = vmatpush1.msra.mxu0 0.0
        %693 = vmatprep.subr.mxu0 0.0
        %694 = vmatpush1.msra.mxu0 0.0
        %695 = vmatprep.subr.mxu0 0.0
        %696 = vmatpush1.msra.mxu0 0.0
        %697 = vmatprep.subr.mxu0 0.0
        %698 = vmatpush1.msra.mxu0 0.0
        %699 = vmatprep.subr.mxu0 0.0
        %700 = vmatpush1.msra.mxu0 0.0
        %701 = vmatprep.subr.mxu0 0.0
        %702 = vmatpush1.msra.mxu0 0.0
        %703 = vmatprep.subr.mxu0 0.0
        %704 = vmatpush1.msra.mxu0 0.0
        %705 = vmatprep.subr.mxu0 0.0
        %706 = vmatpush1.msra.mxu0 0.0
        %707 = vmatprep.subr.mxu0 0.0
        %708 = vmatpush1.msra.mxu0 0.0
        %709 = vmatprep.subr.mxu0 0.0
        %710 = vmatpush1.msra.mxu0 0.0
        %711 = vmatprep.subr.mxu0 0.0
        %712 = vmatpush1.msra.mxu0 0.0
        %713 = vmatprep.subr.mxu0 0.0
        %714 = vmatpush1.msra.mxu0 0.0
        %715 = vmatprep.subr.mxu0 0.0
        %716 = vmatpush1.msra.mxu0 0.0
        %717 = vmatprep.subr.mxu0 0.0
        %718 = vmatpush1.msra.mxu0 0.0
        %719 = vmatprep.subr.mxu0 0.0
        %720 = vmatpush1.msra.mxu0 0.0
        %721 = vmatprep.subr.mxu0 0.0
        %722 = vmatpush1.msra.mxu0 0.0
        %723 = vmatprep.subr.mxu0 0.0
        %724 = vmatpush1.msra.mxu0 0.0
        %725 = vmatprep.subr.mxu0 0.0
        %726 = vmatpush1.msra.mxu0 0.0
        %727 = vmatprep.subr.mxu0 0.0
        %728 = vmatpush1.msra.mxu0 0.0
        %729 = vmatprep.subr.mxu0 0.0
        %730 = vmatpush1.msra.mxu0 0.0
        %731 = vmatprep.subr.mxu0 0.0
        %732 = vmatpush1.msra.mxu0 0.0
        %733 = vmatprep.subr.mxu0 0.0
        %734 = vmatpush1.msra.mxu0 0.0
        %735 = vmatprep.mubr.f32.mxu0 0.0
        %736 = vmatmul.mubr.f32.gmra.mrb[0].mxu0 %v665
        %v737 = vpop.f32.mrb[0].mxu0
        %v738 = vadd.f32 %v651, %v737
        %v739 = vpop.f32.mrb[0].mxu0
        %v740 = vadd.f32 %v653, %v739
        %741 = vdwg.mxu0
        %v742 = vld [vmem:[#allocation2] sm:$0xff]
        %v743 = vld [vmem:[#allocation2 + $0x8] sm:$0xf]
        %s744 = scalar_lea.vmem %s1, 28
        %v745 = vld [vmem:[%s744] sm:$0xf]
        %v748 = vcombine.high %v742, %v742
        %749 = vrot.lane.b32.xlu0 %v742, 95
        %v750 = vpop.permute.xlu0 %749
        %751 = vrot.lane.b32.xlu0 %v748, 95
        %v752 = vpop.permute.xlu0 %751
        %753 = vrot.lane.b32.xlu0 %v743, 95
        %v754 = vpop.permute.xlu0 %753
        %vm755 = vcmask 777216
        %v756 = vsel %vm755, %v750, %v752
        %v757 = vsel %vm755, %v752, %v754
        %v759 = vsel %vm290, %v745, 0
        %v761 = vsel %vm294, %v756, 0
        %v763 = vsel %vm294, %v757, 0
        %765 = vmatprep.subr.mxu0 %v763
        %766 = vmatpush1.msra.mxu0 %v761
        %767 = vmatprep.subr.mxu0 0.0
        %768 = vmatpush1.msra.mxu0 0.0
        %769 = vmatprep.subr.mxu0 0.0
        %770 = vmatpush1.msra.mxu0 0.0
        %771 = vmatprep.subr.mxu0 0.0
        %772 = vmatpush1.msra.mxu0 0.0
        %773 = vmatprep.subr.mxu0 0.0
        %774 = vmatpush1.msra.mxu0 0.0
        %775 = vmatprep.subr.mxu0 0.0
        %776 = vmatpush1.msra.mxu0 0.0
        %777 = vmatprep.subr.mxu0 0.0
        %778 = vmatpush1.msra.mxu0 0.0
        %779 = vmatprep.subr.mxu0 0.0
        %780 = vmatpush1.msra.mxu0 0.0
        %781 = vmatprep.subr.mxu0 0.0
        %782 = vmatpush1.msra.mxu0 0.0
        %783 = vmatprep.subr.mxu0 0.0
        %784 = vmatpush1.msra.mxu0 0.0
        %785 = vmatprep.subr.mxu0 0.0
        %786 = vmatpush1.msra.mxu0 0.0
        %787 = vmatprep.subr.mxu0 0.0
        %788 = vmatpush1.msra.mxu0 0.0
        %789 = vmatprep.subr.mxu0 0.0
        %790 = vmatpush1.msra.mxu0 0.0
        %791 = vmatprep.subr.mxu0 0.0
        %792 = vmatpush1.msra.mxu0 0.0
        %793 = vmatprep.subr.mxu0 0.0
        %794 = vmatpush1.msra.mxu0 0.0
        %795 = vmatprep.subr.mxu0 0.0
        %796 = vmatpush1.msra.mxu0 0.0
        %797 = vmatprep.subr.mxu0 0.0
        %798 = vmatpush1.msra.mxu0 0.0
        %799 = vmatprep.subr.mxu0 0.0
        %800 = vmatpush1.msra.mxu0 0.0
        %801 = vmatprep.subr.mxu0 0.0
        %802 = vmatpush1.msra.mxu0 0.0
        %803 = vmatprep.subr.mxu0 0.0
        %804 = vmatpush1.msra.mxu0 0.0
        %805 = vmatprep.subr.mxu0 0.0
        %806 = vmatpush1.msra.mxu0 0.0
        %807 = vmatprep.subr.mxu0 0.0
        %808 = vmatpush1.msra.mxu0 0.0
        %809 = vmatprep.subr.mxu0 0.0
        %810 = vmatpush1.msra.mxu0 0.0
        %811 = vmatprep.subr.mxu0 0.0
        %812 = vmatpush1.msra.mxu0 0.0
        %813 = vmatprep.subr.mxu0 0.0
        %814 = vmatpush1.msra.mxu0 0.0
        %815 = vmatprep.subr.mxu0 0.0
        %816 = vmatpush1.msra.mxu0 0.0
        %817 = vmatprep.subr.mxu0 0.0
        %818 = vmatpush1.msra.mxu0 0.0
        %819 = vmatprep.subr.mxu0 0.0
        %820 = vmatpush1.msra.mxu0 0.0
        %821 = vmatprep.subr.mxu0 0.0
        %822 = vmatpush1.msra.mxu0 0.0
        %823 = vmatprep.subr.mxu0 0.0
        %824 = vmatpush1.msra.mxu0 0.0
        %825 = vmatprep.subr.mxu0 0.0
        %826 = vmatpush1.msra.mxu0 0.0
        %827 = vmatprep.subr.mxu0 0.0
        %828 = vmatpush1.msra.mxu0 0.0
        %829 = vmatprep.mubr.f32.mxu0 0.0
        %830 = vmatmul.mubr.f32.gmra.mrb[0].mxu0 %v759
        %v831 = vpop.f32.mrb[0].mxu0
        %v832 = vadd.f32 0.0, %v831
        %v833 = vpop.f32.mrb[0].mxu0
        %v834 = vadd.f32 0.0, %v833
        %835 = vdwg.mxu0
        %v836 = vadd.f32 %v738, %v832
        %v837 = vadd.f32 %v740, %v834
        %v838 = vadd.f32 %v557, %v836
        %v839 = vadd.f32 %v558, %v837
        %v840 = vld [vmem:[#allocation2] sm:$0xff]
        %v841 = vld [vmem:[#allocation2 + $0x8] sm:$0xf]
        %s842 = scalar_lea.vmem %s1, 8
        %v843 = vld [vmem:[%s842] sm:$0xf]
        %s844 = scalar_lea.vmem %s1, 20
        %v845 = vld [vmem:[%s844] sm:$0xf]
        %v848 = vcombine.high %v840, %v840
        %849 = vrot.lane.b32.xlu0 %v840, 110
        %v850 = vpop.permute.xlu0 %849
        %851 = vrot.lane.b32.xlu0 %v848, 110
        %v852 = vpop.permute.xlu0 %851
        %853 = vrot.lane.b32.xlu0 %v841, 110
        %v854 = vpop.permute.xlu0 %853
        %vm855 = vcmask 900096
        %v856 = vsel %vm855, %v850, %v852
        %v857 = vsel %vm855, %v852, %v854
        %v859 = vsel %vm290, %v845, 0
        %v861 = vsel %vm294, %v856, 0
        %v863 = vsel %vm294, %v857, 0
        %865 = vmatprep.subr.mxu0 %v863
        %866 = vmatpush1.msra.mxu0 %v861
        %867 = vmatprep.subr.mxu0 0.0
        %868 = vmatpush1.msra.mxu0 0.0
        %869 = vmatprep.subr.mxu0 0.0
        %870 = vmatpush1.msra.mxu0 0.0
        %871 = vmatprep.subr.mxu0 0.0
        %872 = vmatpush1.msra.mxu0 0.0
        %873 = vmatprep.subr.mxu0 0.0
        %874 = vmatpush1.msra.mxu0 0.0
        %875 = vmatprep.subr.mxu0 0.0
        %876 = vmatpush1.msra.mxu0 0.0
        %877 = vmatprep.subr.mxu0 0.0
        %878 = vmatpush1.msra.mxu0 0.0
        %879 = vmatprep.subr.mxu0 0.0
        %880 = vmatpush1.msra.mxu0 0.0
        %881 = vmatprep.subr.mxu0 0.0
        %882 = vmatpush1.msra.mxu0 0.0
        %883 = vmatprep.subr.mxu0 0.0
        %884 = vmatpush1.msra.mxu0 0.0
        %885 = vmatprep.subr.mxu0 0.0
        %886 = vmatpush1.msra.mxu0 0.0
        %887 = vmatprep.subr.mxu0 0.0
        %888 = vmatpush1.msra.mxu0 0.0
        %889 = vmatprep.subr.mxu0 0.0
        %890 = vmatpush1.msra.mxu0 0.0
        %891 = vmatprep.subr.mxu0 0.0
        %892 = vmatpush1.msra.mxu0 0.0
        %893 = vmatprep.subr.mxu0 0.0
        %894 = vmatpush1.msra.mxu0 0.0
        %895 = vmatprep.subr.mxu0 0.0
        %896 = vmatpush1.msra.mxu0 0.0
        %897 = vmatprep.subr.mxu0 0.0
        %898 = vmatpush1.msra.mxu0 0.0
        %899 = vmatprep.subr.mxu0 0.0
        %900 = vmatpush1.msra.mxu0 0.0
        %901 = vmatprep.subr.mxu0 0.0
        %902 = vmatpush1.msra.mxu0 0.0
        %903 = vmatprep.subr.mxu0 0.0
        %904 = vmatpush1.msra.mxu0 0.0
        %905 = vmatprep.subr.mxu0 0.0
        %906 = vmatpush1.msra.mxu0 0.0
        %907 = vmatprep.subr.mxu0 0.0
        %908 = vmatpush1.msra.mxu0 0.0
        %909 = vmatprep.subr.mxu0 0.0
        %910 = vmatpush1.msra.mxu0 0.0
        %911 = vmatprep.subr.mxu0 0.0
        %912 = vmatpush1.msra.mxu0 0.0
        %913 = vmatprep.subr.mxu0 0.0
        %914 = vmatpush1.msra.mxu0 0.0
        %915 = vmatprep.subr.mxu0 0.0
        %916 = vmatpush1.msra.mxu0 0.0
        %917 = vmatprep.subr.mxu0 0.0
        %918 = vmatpush1.msra.mxu0 0.0
        %919 = vmatprep.subr.mxu0 0.0
        %920 = vmatpush1.msra.mxu0 0.0
        %921 = vmatprep.subr.mxu0 0.0
        %922 = vmatpush1.msra.mxu0 0.0
        %923 = vmatprep.subr.mxu0 0.0
        %924 = vmatpush1.msra.mxu0 0.0
        %925 = vmatprep.subr.mxu0 0.0
        %926 = vmatpush1.msra.mxu0 0.0
        %927 = vmatprep.subr.mxu0 0.0
        %928 = vmatpush1.msra.mxu0 0.0
        %929 = vmatprep.mubr.f32.mxu0 0.0
        %930 = vmatmul.mubr.f32.gmra.mrb[0].mxu0 %v859
        %v931 = vpop.f32.mrb[0].mxu0
        %v932 = vadd.f32 0.0, %v931
        %v933 = vpop.f32.mrb[0].mxu0
        %v934 = vadd.f32 0.0, %v933
        %935 = vdwg.mxu0
        %936 = vrot.lane.b32.xlu0 %v840, 126
        %v937 = vpop.permute.xlu0 %936
        %938 = vrot.lane.b32.xlu0 %v848, 126
        %v939 = vpop.permute.xlu0 %938
        %940 = vrot.lane.b32.xlu0 %v841, 126
        %v941 = vpop.permute.xlu0 %940
        %vm942 = vcmask 1031168
        %v943 = vsel %vm942, %v937, %v939
        %v944 = vsel %vm942, %v939, %v941
        %v946 = vsel %vm290, %v843, 0
        %v948 = vsel %vm294, %v943, 0
        %v950 = vsel %vm294, %v944, 0
        %952 = vmatprep.subr.mxu0 %v950
        %953 = vmatpush1.msra.mxu0 %v948
        %954 = vmatprep.subr.mxu0 0.0
        %955 = vmatpush1.msra.mxu0 0.0
        %956 = vmatprep.subr.mxu0 0.0
        %957 = vmatpush1.msra.mxu0 0.0
        %958 = vmatprep.subr.mxu0 0.0
        %959 = vmatpush1.msra.mxu0 0.0
        %960 = vmatprep.subr.mxu0 0.0
        %961 = vmatpush1.msra.mxu0 0.0
        %962 = vmatprep.subr.mxu0 0.0
        %963 = vmatpush1.msra.mxu0 0.0
        %964 = vmatprep.subr.mxu0 0.0
        %965 = vmatpush1.msra.mxu0 0.0
        %966 = vmatprep.subr.mxu0 0.0
        %967 = vmatpush1.msra.mxu0 0.0
        %968 = vmatprep.subr.mxu0 0.0
        %969 = vmatpush1.msra.mxu0 0.0
        %970 = vmatprep.subr.mxu0 0.0
        %971 = vmatpush1.msra.mxu0 0.0
        %972 = vmatprep.subr.mxu0 0.0
        %973 = vmatpush1.msra.mxu0 0.0
        %974 = vmatprep.subr.mxu0 0.0
        %975 = vmatpush1.msra.mxu0 0.0
        %976 = vmatprep.subr.mxu0 0.0
        %977 = vmatpush1.msra.mxu0 0.0
        %978 = vmatprep.subr.mxu0 0.0
        %979 = vmatpush1.msra.mxu0 0.0
        %980 = vmatprep.subr.mxu0 0.0
        %981 = vmatpush1.msra.mxu0 0.0
        %982 = vmatprep.subr.mxu0 0.0
        %983 = vmatpush1.msra.mxu0 0.0
        %984 = vmatprep.subr.mxu0 0.0
        %985 = vmatpush1.msra.mxu0 0.0
        %986 = vmatprep.subr.mxu0 0.0
        %987 = vmatpush1.msra.mxu0 0.0
        %988 = vmatprep.subr.mxu0 0.0
        %989 = vmatpush1.msra.mxu0 0.0
        %990 = vmatprep.subr.mxu0 0.0
        %991 = vmatpush1.msra.mxu0 0.0
        %992 = vmatprep.subr.mxu0 0.0
        %993 = vmatpush1.msra.mxu0 0.0
        %994 = vmatprep.subr.mxu0 0.0
        %995 = vmatpush1.msra.mxu0 0.0
        %996 = vmatprep.subr.mxu0 0.0
        %997 = vmatpush1.msra.mxu0 0.0
        %998 = vmatprep.subr.mxu0 0.0
        %999 = vmatpush1.msra.mxu0 0.0
        %1000 = vmatprep.subr.mxu0 0.0
        %1001 = vmatpush1.msra.mxu0 0.0
        %1002 = vmatprep.subr.mxu0 0.0
        %1003 = vmatpush1.msra.mxu0 0.0
        %1004 = vmatprep.subr.mxu0 0.0
        %1005 = vmatpush1.msra.mxu0 0.0
        %1006 = vmatprep.subr.mxu0 0.0
        %1007 = vmatpush1.msra.mxu0 0.0
        %1008 = vmatprep.subr.mxu0 0.0
        %1009 = vmatpush1.msra.mxu0 0.0
        %1010 = vmatprep.subr.mxu0 0.0
        %1011 = vmatpush1.msra.mxu0 0.0
        %1012 = vmatprep.subr.mxu0 0.0
        %1013 = vmatpush1.msra.mxu0 0.0
        %1014 = vmatprep.subr.mxu0 0.0
        %1015 = vmatpush1.msra.mxu0 0.0
        %1016 = vmatprep.mubr.f32.mxu0 0.0
        %1017 = vmatmul.mubr.f32.gmra.mrb[0].mxu0 %v946
        %v1018 = vpop.f32.mrb[0].mxu0
        %v1019 = vadd.f32 %v932, %v1018
        %v1020 = vpop.f32.mrb[0].mxu0
        %v1021 = vadd.f32 %v934, %v1020
        %1022 = vdwg.mxu0
        %v1023 = vld [vmem:[#allocation2] sm:$0xff]
        %v1024 = vld [vmem:[#allocation2 + $0x8] sm:$0xf]
        %s1025 = scalar_lea.vmem %s1, 32
        %v1026 = vld [vmem:[%s1025] sm:$0xf]
        %v1029 = vcombine.high %v1023, %v1023
        %1030 = vrot.lane.b32.xlu0 %v1023, 94
        %v1031 = vpop.permute.xlu0 %1030
        %1032 = vrot.lane.b32.xlu0 %v1029, 94
        %v1033 = vpop.permute.xlu0 %1032
        %1034 = vrot.lane.b32.xlu0 %v1024, 94
        %v1035 = vpop.permute.xlu0 %1034
        %vm1036 = vcmask 769024
        %v1037 = vsel %vm1036, %v1031, %v1033
        %v1038 = vsel %vm1036, %v1033, %v1035
        %v1040 = vsel %vm290, %v1026, 0
        %v1042 = vsel %vm294, %v1037, 0
        %v1044 = vsel %vm294, %v1038, 0
        %1046 = vmatprep.subr.mxu0 %v1044
        %1047 = vmatpush1.msra.mxu0 %v1042
        %1048 = vmatprep.subr.mxu0 0.0
        %1049 = vmatpush1.msra.mxu0 0.0
        %1050 = vmatprep.subr.mxu0 0.0
        %1051 = vmatpush1.msra.mxu0 0.0
        %1052 = vmatprep.subr.mxu0 0.0
        %1053 = vmatpush1.msra.mxu0 0.0
        %1054 = vmatprep.subr.mxu0 0.0
        %1055 = vmatpush1.msra.mxu0 0.0
        %1056 = vmatprep.subr.mxu0 0.0
        %1057 = vmatpush1.msra.mxu0 0.0
        %1058 = vmatprep.subr.mxu0 0.0
        %1059 = vmatpush1.msra.mxu0 0.0
        %1060 = vmatprep.subr.mxu0 0.0
        %1061 = vmatpush1.msra.mxu0 0.0
        %1062 = vmatprep.subr.mxu0 0.0
        %1063 = vmatpush1.msra.mxu0 0.0
        %1064 = vmatprep.subr.mxu0 0.0
        %1065 = vmatpush1.msra.mxu0 0.0
        %1066 = vmatprep.subr.mxu0 0.0
        %1067 = vmatpush1.msra.mxu0 0.0
        %1068 = vmatprep.subr.mxu0 0.0
        %1069 = vmatpush1.msra.mxu0 0.0
        %1070 = vmatprep.subr.mxu0 0.0
        %1071 = vmatpush1.msra.mxu0 0.0
        %1072 = vmatprep.subr.mxu0 0.0
        %1073 = vmatpush1.msra.mxu0 0.0
        %1074 = vmatprep.subr.mxu0 0.0
        %1075 = vmatpush1.msra.mxu0 0.0
        %1076 = vmatprep.subr.mxu0 0.0
        %1077 = vmatpush1.msra.mxu0 0.0
        %1078 = vmatprep.subr.mxu0 0.0
        %1079 = vmatpush1.msra.mxu0 0.0
        %1080 = vmatprep.subr.mxu0 0.0
        %1081 = vmatpush1.msra.mxu0 0.0
        %1082 = vmatprep.subr.mxu0 0.0
        %1083 = vmatpush1.msra.mxu0 0.0
        %1084 = vmatprep.subr.mxu0 0.0
        %1085 = vmatpush1.msra.mxu0 0.0
        %1086 = vmatprep.subr.mxu0 0.0
        %1087 = vmatpush1.msra.mxu0 0.0
        %1088 = vmatprep.subr.mxu0 0.0
        %1089 = vmatpush1.msra.mxu0 0.0
        %1090 = vmatprep.subr.mxu0 0.0
        %1091 = vmatpush1.msra.mxu0 0.0
        %1092 = vmatprep.subr.mxu0 0.0
        %1093 = vmatpush1.msra.mxu0 0.0
        %1094 = vmatprep.subr.mxu0 0.0
        %1095 = vmatpush1.msra.mxu0 0.0
        %1096 = vmatprep.subr.mxu0 0.0
        %1097 = vmatpush1.msra.mxu0 0.0
        %1098 = vmatprep.subr.mxu0 0.0
        %1099 = vmatpush1.msra.mxu0 0.0
        %1100 = vmatprep.subr.mxu0 0.0
        %1101 = vmatpush1.msra.mxu0 0.0
        %1102 = vmatprep.subr.mxu0 0.0
        %1103 = vmatpush1.msra.mxu0 0.0
        %1104 = vmatprep.subr.mxu0 0.0
        %1105 = vmatpush1.msra.mxu0 0.0
        %1106 = vmatprep.subr.mxu0 0.0
        %1107 = vmatpush1.msra.mxu0 0.0
        %1108 = vmatprep.subr.mxu0 0.0
        %1109 = vmatpush1.msra.mxu0 0.0
        %1110 = vmatprep.mubr.f32.mxu0 0.0
        %1111 = vmatmul.mubr.f32.gmra.mrb[0].mxu0 %v1040
        %v1112 = vpop.f32.mrb[0].mxu0
        %v1113 = vadd.f32 0.0, %v1112
        %v1114 = vpop.f32.mrb[0].mxu0
        %v1115 = vadd.f32 0.0, %v1114
        %1116 = vdwg.mxu0
        %v1117 = vadd.f32 %v1019, %v1113
        %v1118 = vadd.f32 %v1021, %v1115
        %v1120 = vlaneseq
        %v1121 = vshrl.u32 %v1120, 7
        %v1122 = vsub.s32 0, %v1121
        %v1123 = vrot.slane %v253, %v1122
        %v1124 = vlaneseq
        %v1125 = vshrl.u32 %v1124, 7
        %v1126 = vsub.s32 1, %v1125
        %v1127 = vrot.slane %v253, %v1126
        %v1130 = vmul.f32 %v1117, %v1123
        %v1131 = vmul.f32 %v1118, %v1127
        %v1132 = vadd.f32 %v838, %v1130
        %v1133 = vadd.f32 %v839, %v1131
        %v1134 = vld [vmem:[%s2] sm:$0xf]
        %1136 = vset.pattern.permute.xlu0 0
        %1137 = vperm.xlu0 %1136, %v1134
        %v1138 = vpop.permute.xlu0 %1137
        %v1140 = vadd.f32 %v1132, %v1138
        %v1141 = vadd.f32 %v1133, %v1138
        %v1142 = vmax.f32 %v1140, 0.0
        %v1143 = vmax.f32 %v1141, 0.0
        %v1146 = vcombine.low %v1142, %v1143
        %1147 = vrot.lane.b32.xlu0 %v1146, 17
        %v1148 = vpop.permute.xlu0 %1147
        %v1149 = vrot.slane %v1148, 4
        %v1150 = vsel %vm262, %v1149, %v1148
        %1153 = vst.msk [vmem:[#allocation3] sm:$0xff] %vm268, %v1150
        %1154 = vst.msk [vmem:[#allocation3 + $0x8] sm:$0xf] %vm254, %v1149
        %v1155 = vld [vmem:[#allocation3] sm:$0xff]
        %v1156 = vld [vmem:[%s3] sm:$0xf]
        %v1157 = vld [vmem:[#allocation3 + $0x8] sm:$0xf]
        %s1158 = scalar_lea.vmem %s3, 12
        %v1159 = vld [vmem:[%s1158] sm:$0xf]
        %v1162 = vcombine.high %v1155, %v1155
        %1163 = vrot.lane.b32.xlu0 %v1155, 112
        %v1164 = vpop.permute.xlu0 %1163
        %1165 = vrot.lane.b32.xlu0 %v1162, 112
        %v1166 = vpop.permute.xlu0 %1165
        %1167 = vrot.lane.b32.xlu0 %v1157, 112
        %v1168 = vpop.permute.xlu0 %1167
        %v1169 = vsel %vm287, %v1164, %v1166
        %v1170 = vsel %vm287, %v1166, %v1168
        %v1172 = vsel %vm290, %v1159, 0
        %v1174 = vsel %vm294, %v1169, 0
        %v1176 = vsel %vm294, %v1170, 0
        %1178 = vmatprep.subr.mxu0 %v1176
        %1179 = vmatpush1.msra.mxu0 %v1174
        %1180 = vmatprep.subr.mxu0 0.0
        %1181 = vmatpush1.msra.mxu0 0.0
        %1182 = vmatprep.subr.mxu0 0.0
        %1183 = vmatpush1.msra.mxu0 0.0
        %1184 = vmatprep.subr.mxu0 0.0
        %1185 = vmatpush1.msra.mxu0 0.0
        %1186 = vmatprep.subr.mxu0 0.0
        %1187 = vmatpush1.msra.mxu0 0.0
        %1188 = vmatprep.subr.mxu0 0.0
        %1189 = vmatpush1.msra.mxu0 0.0
        %1190 = vmatprep.subr.mxu0 0.0
        %1191 = vmatpush1.msra.mxu0 0.0
        %1192 = vmatprep.subr.mxu0 0.0
        %1193 = vmatpush1.msra.mxu0 0.0
        %1194 = vmatprep.subr.mxu0 0.0
        %1195 = vmatpush1.msra.mxu0 0.0
        %1196 = vmatprep.subr.mxu0 0.0
        %1197 = vmatpush1.msra.mxu0 0.0
        %1198 = vmatprep.subr.mxu0 0.0
        %1199 = vmatpush1.msra.mxu0 0.0
        %1200 = vmatprep.subr.mxu0 0.0
        %1201 = vmatpush1.msra.mxu0 0.0
        %1202 = vmatprep.subr.mxu0 0.0
        %1203 = vmatpush1.msra.mxu0 0.0
        %1204 = vmatprep.subr.mxu0 0.0
        %1205 = vmatpush1.msra.mxu0 0.0
        %1206 = vmatprep.subr.mxu0 0.0
        %1207 = vmatpush1.msra.mxu0 0.0
        %1208 = vmatprep.subr.mxu0 0.0
        %1209 = vmatpush1.msra.mxu0 0.0
        %1210 = vmatprep.subr.mxu0 0.0
        %1211 = vmatpush1.msra.mxu0 0.0
        %1212 = vmatprep.subr.mxu0 0.0
        %1213 = vmatpush1.msra.mxu0 0.0
        %1214 = vmatprep.subr.mxu0 0.0
        %1215 = vmatpush1.msra.mxu0 0.0
        %1216 = vmatprep.subr.mxu0 0.0
        %1217 = vmatpush1.msra.mxu0 0.0
        %1218 = vmatprep.subr.mxu0 0.0
        %1219 = vmatpush1.msra.mxu0 0.0
        %1220 = vmatprep.subr.mxu0 0.0
        %1221 = vmatpush1.msra.mxu0 0.0
        %1222 = vmatprep.subr.mxu0 0.0
        %1223 = vmatpush1.msra.mxu0 0.0
        %1224 = vmatprep.subr.mxu0 0.0
        %1225 = vmatpush1.msra.mxu0 0.0
        %1226 = vmatprep.subr.mxu0 0.0
        %1227 = vmatpush1.msra.mxu0 0.0
        %1228 = vmatprep.subr.mxu0 0.0
        %1229 = vmatpush1.msra.mxu0 0.0
        %1230 = vmatprep.subr.mxu0 0.0
        %1231 = vmatpush1.msra.mxu0 0.0
        %1232 = vmatprep.subr.mxu0 0.0
        %1233 = vmatpush1.msra.mxu0 0.0
        %1234 = vmatprep.subr.mxu0 0.0
        %1235 = vmatpush1.msra.mxu0 0.0
        %1236 = vmatprep.subr.mxu0 0.0
        %1237 = vmatpush1.msra.mxu0 0.0
        %1238 = vmatprep.subr.mxu0 0.0
        %1239 = vmatpush1.msra.mxu0 0.0
        %1240 = vmatprep.subr.mxu0 0.0
        %1241 = vmatpush1.msra.mxu0 0.0
        %1242 = vmatprep.mubr.f32.mxu0 0.0
        %1243 = vmatmul.mubr.f32.gmra.mrb[0].mxu0 %v1172
        %v1244 = vpop.f32.mrb[0].mxu0
        %v1245 = vadd.f32 0.0, %v1244
        %v1246 = vpop.f32.mrb[0].mxu0
        %v1247 = vadd.f32 0.0, %v1246
        %1248 = vdwg.mxu0
        %v1250 = vsel %vm290, %v1156, 0
        %v1252 = vsel %vm294, %v1155, 0
        %v1254 = vsel %vm294, %v1162, 0
        %1256 = vmatprep.subr.mxu0 %v1254
        %1257 = vmatpush1.msra.mxu0 %v1252
        %1258 = vmatprep.subr.mxu0 0.0
        %1259 = vmatpush1.msra.mxu0 0.0
        %1260 = vmatprep.subr.mxu0 0.0
        %1261 = vmatpush1.msra.mxu0 0.0
        %1262 = vmatprep.subr.mxu0 0.0
        %1263 = vmatpush1.msra.mxu0 0.0
        %1264 = vmatprep.subr.mxu0 0.0
        %1265 = vmatpush1.msra.mxu0 0.0
        %1266 = vmatprep.subr.mxu0 0.0
        %1267 = vmatpush1.msra.mxu0 0.0
        %1268 = vmatprep.subr.mxu0 0.0
        %1269 = vmatpush1.msra.mxu0 0.0
        %1270 = vmatprep.subr.mxu0 0.0
        %1271 = vmatpush1.msra.mxu0 0.0
        %1272 = vmatprep.subr.mxu0 0.0
        %1273 = vmatpush1.msra.mxu0 0.0
        %1274 = vmatprep.subr.mxu0 0.0
        %1275 = vmatpush1.msra.mxu0 0.0
        %1276 = vmatprep.subr.mxu0 0.0
        %1277 = vmatpush1.msra.mxu0 0.0
        %1278 = vmatprep.subr.mxu0 0.0
        %1279 = vmatpush1.msra.mxu0 0.0
        %1280 = vmatprep.subr.mxu0 0.0
        %1281 = vmatpush1.msra.mxu0 0.0
        %1282 = vmatprep.subr.mxu0 0.0
        %1283 = vmatpush1.msra.mxu0 0.0
        %1284 = vmatprep.subr.mxu0 0.0
        %1285 = vmatpush1.msra.mxu0 0.0
        %1286 = vmatprep.subr.mxu0 0.0
        %1287 = vmatpush1.msra.mxu0 0.0
        %1288 = vmatprep.subr.mxu0 0.0
        %1289 = vmatpush1.msra.mxu0 0.0
        %1290 = vmatprep.subr.mxu0 0.0
        %1291 = vmatpush1.msra.mxu0 0.0
        %1292 = vmatprep.subr.mxu0 0.0
        %1293 = vmatpush1.msra.mxu0 0.0
        %1294 = vmatprep.subr.mxu0 0.0
        %1295 = vmatpush1.msra.mxu0 0.0
        %1296 = vmatprep.subr.mxu0 0.0
        %1297 = vmatpush1.msra.mxu0 0.0
        %1298 = vmatprep.subr.mxu0 0.0
        %1299 = vmatpush1.msra.mxu0 0.0
        %1300 = vmatprep.subr.mxu0 0.0
        %1301 = vmatpush1.msra.mxu0 0.0
        %1302 = vmatprep.subr.mxu0 0.0
        %1303 = vmatpush1.msra.mxu0 0.0
        %1304 = vmatprep.subr.mxu0 0.0
        %1305 = vmatpush1.msra.mxu0 0.0
        %1306 = vmatprep.subr.mxu0 0.0
        %1307 = vmatpush1.msra.mxu0 0.0
        %1308 = vmatprep.subr.mxu0 0.0
        %1309 = vmatpush1.msra.mxu0 0.0
        %1310 = vmatprep.subr.mxu0 0.0
        %1311 = vmatpush1.msra.mxu0 0.0
        %1312 = vmatprep.subr.mxu0 0.0
        %1313 = vmatpush1.msra.mxu0 0.0
        %1314 = vmatprep.subr.mxu0 0.0
        %1315 = vmatpush1.msra.mxu0 0.0
        %1316 = vmatprep.subr.mxu0 0.0
        %1317 = vmatpush1.msra.mxu0 0.0
        %1318 = vmatprep.subr.mxu0 0.0
        %1319 = vmatpush1.msra.mxu0 0.0
        %1320 = vmatprep.mubr.f32.mxu0 0.0
        %1321 = vmatmul.mubr.f32.gmra.mrb[0].mxu0 %v1250
        %v1322 = vpop.f32.mrb[0].mxu0
        %v1323 = vadd.f32 %v1245, %v1322
        %v1324 = vpop.f32.mrb[0].mxu0
        %v1325 = vadd.f32 %v1247, %v1324
        %1326 = vdwg.mxu0
        %v1327 = vld [vmem:[#allocation3] sm:$0xff]
        %v1328 = vld [vmem:[#allocation3 + $0x8] sm:$0xf]
        %s1329 = scalar_lea.vmem %s3, 24
        %v1330 = vld [vmem:[%s1329] sm:$0xf]
        %v1333 = vcombine.high %v1327, %v1327
        %1334 = vrot.lane.b32.xlu0 %v1327, 96
        %v1335 = vpop.permute.xlu0 %1334
        %1336 = vrot.lane.b32.xlu0 %v1333, 96
        %v1337 = vpop.permute.xlu0 %1336
        %1338 = vrot.lane.b32.xlu0 %v1328, 96
        %v1339 = vpop.permute.xlu0 %1338
        %v1340 = vsel %vm461, %v1335, %v1337
        %v1341 = vsel %vm461, %v1337, %v1339
        %v1343 = vsel %vm290, %v1330, 0
        %v1345 = vsel %vm294, %v1340, 0
        %v1347 = vsel %vm294, %v1341, 0
        %1349 = vmatprep.subr.mxu0 %v1347
        %1350 = vmatpush1.msra.mxu0 %v1345
        %1351 = vmatprep.subr.mxu0 0.0
        %1352 = vmatpush1.msra.mxu0 0.0
        %1353 = vmatprep.subr.mxu0 0.0
        %1354 = vmatpush1.msra.mxu0 0.0
        %1355 = vmatprep.subr.mxu0 0.0
        %1356 = vmatpush1.msra.mxu0 0.0
        %1357 = vmatprep.subr.mxu0 0.0
        %1358 = vmatpush1.msra.mxu0 0.0
        %1359 = vmatprep.subr.mxu0 0.0
        %1360 = vmatpush1.msra.mxu0 0.0
        %1361 = vmatprep.subr.mxu0 0.0
        %1362 = vmatpush1.msra.mxu0 0.0
        %1363 = vmatprep.subr.mxu0 0.0
        %1364 = vmatpush1.msra.mxu0 0.0
        %1365 = vmatprep.subr.mxu0 0.0
        %1366 = vmatpush1.msra.mxu0 0.0
        %1367 = vmatprep.subr.mxu0 0.0
        %1368 = vmatpush1.msra.mxu0 0.0
        %1369 = vmatprep.subr.mxu0 0.0
        %1370 = vmatpush1.msra.mxu0 0.0
        %1371 = vmatprep.subr.mxu0 0.0
        %1372 = vmatpush1.msra.mxu0 0.0
        %1373 = vmatprep.subr.mxu0 0.0
        %1374 = vmatpush1.msra.mxu0 0.0
        %1375 = vmatprep.subr.mxu0 0.0
        %1376 = vmatpush1.msra.mxu0 0.0
        %1377 = vmatprep.subr.mxu0 0.0
        %1378 = vmatpush1.msra.mxu0 0.0
        %1379 = vmatprep.subr.mxu0 0.0
        %1380 = vmatpush1.msra.mxu0 0.0
        %1381 = vmatprep.subr.mxu0 0.0
        %1382 = vmatpush1.msra.mxu0 0.0
        %1383 = vmatprep.subr.mxu0 0.0
        %1384 = vmatpush1.msra.mxu0 0.0
        %1385 = vmatprep.subr.mxu0 0.0
        %1386 = vmatpush1.msra.mxu0 0.0
        %1387 = vmatprep.subr.mxu0 0.0
        %1388 = vmatpush1.msra.mxu0 0.0
        %1389 = vmatprep.subr.mxu0 0.0
        %1390 = vmatpush1.msra.mxu0 0.0
        %1391 = vmatprep.subr.mxu0 0.0
        %1392 = vmatpush1.msra.mxu0 0.0
        %1393 = vmatprep.subr.mxu0 0.0
        %1394 = vmatpush1.msra.mxu0 0.0
        %1395 = vmatprep.subr.mxu0 0.0
        %1396 = vmatpush1.msra.mxu0 0.0
        %1397 = vmatprep.subr.mxu0 0.0
        %1398 = vmatpush1.msra.mxu0 0.0
        %1399 = vmatprep.subr.mxu0 0.0
        %1400 = vmatpush1.msra.mxu0 0.0
        %1401 = vmatprep.subr.mxu0 0.0
        %1402 = vmatpush1.msra.mxu0 0.0
        %1403 = vmatprep.subr.mxu0 0.0
        %1404 = vmatpush1.msra.mxu0 0.0
        %1405 = vmatprep.subr.mxu0 0.0
        %1406 = vmatpush1.msra.mxu0 0.0
        %1407 = vmatprep.subr.mxu0 0.0
        %1408 = vmatpush1.msra.mxu0 0.0
        %1409 = vmatprep.subr.mxu0 0.0
        %1410 = vmatpush1.msra.mxu0 0.0
        %1411 = vmatprep.subr.mxu0 0.0
        %1412 = vmatpush1.msra.mxu0 0.0
        %1413 = vmatprep.mubr.f32.mxu0 0.0
        %1414 = vmatmul.mubr.f32.gmra.mrb[0].mxu0 %v1343
        %v1415 = vpop.f32.mrb[0].mxu0
        %v1416 = vadd.f32 0.0, %v1415
        %v1417 = vpop.f32.mrb[0].mxu0
        %v1418 = vadd.f32 0.0, %v1417
        %1419 = vdwg.mxu0
        %v1420 = vadd.f32 %v1323, %v1416
        %v1421 = vadd.f32 %v1325, %v1418
        %v1422 = vmul.f32 %v1420, %v548
        %v1423 = vmul.f32 %v1421, %v552
        %v1424 = vadd.f32 %v1422, 0.0
        %v1425 = vadd.f32 %v1423, 0.0
        %v1426 = vld [vmem:[#allocation3] sm:$0xff]
        %v1427 = vld [vmem:[#allocation3 + $0x8] sm:$0xf]
        %s1428 = scalar_lea.vmem %s3, 4
        %v1429 = vld [vmem:[%s1428] sm:$0xf]
        %s1430 = scalar_lea.vmem %s3, 16
        %v1431 = vld [vmem:[%s1430] sm:$0xf]
        %v1434 = vcombine.high %v1426, %v1426
        %1435 = vrot.lane.b32.xlu0 %v1426, 111
        %v1436 = vpop.permute.xlu0 %1435
        %1437 = vrot.lane.b32.xlu0 %v1434, 111
        %v1438 = vpop.permute.xlu0 %1437
        %1439 = vrot.lane.b32.xlu0 %v1427, 111
        %v1440 = vpop.permute.xlu0 %1439
        %v1441 = vsel %vm574, %v1436, %v1438
        %v1442 = vsel %vm574, %v1438, %v1440
        %v1444 = vsel %vm290, %v1431, 0
        %v1446 = vsel %vm294, %v1441, 0
        %v1448 = vsel %vm294, %v1442, 0
        %1450 = vmatprep.subr.mxu0 %v1448
        %1451 = vmatpush1.msra.mxu0 %v1446
        %1452 = vmatprep.subr.mxu0 0.0
        %1453 = vmatpush1.msra.mxu0 0.0
        %1454 = vmatprep.subr.mxu0 0.0
        %1455 = vmatpush1.msra.mxu0 0.0
        %1456 = vmatprep.subr.mxu0 0.0
        %1457 = vmatpush1.msra.mxu0 0.0
        %1458 = vmatprep.subr.mxu0 0.0
        %1459 = vmatpush1.msra.mxu0 0.0
        %1460 = vmatprep.subr.mxu0 0.0
        %1461 = vmatpush1.msra.mxu0 0.0
        %1462 = vmatprep.subr.mxu0 0.0
        %1463 = vmatpush1.msra.mxu0 0.0
        %1464 = vmatprep.subr.mxu0 0.0
        %1465 = vmatpush1.msra.mxu0 0.0
        %1466 = vmatprep.subr.mxu0 0.0
        %1467 = vmatpush1.msra.mxu0 0.0
        %1468 = vmatprep.subr.mxu0 0.0
        %1469 = vmatpush1.msra.mxu0 0.0
        %1470 = vmatprep.subr.mxu0 0.0
        %1471 = vmatpush1.msra.mxu0 0.0
        %1472 = vmatprep.subr.mxu0 0.0
        %1473 = vmatpush1.msra.mxu0 0.0
        %1474 = vmatprep.subr.mxu0 0.0
        %1475 = vmatpush1.msra.mxu0 0.0
        %1476 = vmatprep.subr.mxu0 0.0
        %1477 = vmatpush1.msra.mxu0 0.0
        %1478 = vmatprep.subr.mxu0 0.0
        %1479 = vmatpush1.msra.mxu0 0.0
        %1480 = vmatprep.subr.mxu0 0.0
        %1481 = vmatpush1.msra.mxu0 0.0
        %1482 = vmatprep.subr.mxu0 0.0
        %1483 = vmatpush1.msra.mxu0 0.0
        %1484 = vmatprep.subr.mxu0 0.0
        %1485 = vmatpush1.msra.mxu0 0.0
        %1486 = vmatprep.subr.mxu0 0.0
        %1487 = vmatpush1.msra.mxu0 0.0
        %1488 = vmatprep.subr.mxu0 0.0
        %1489 = vmatpush1.msra.mxu0 0.0
        %1490 = vmatprep.subr.mxu0 0.0
        %1491 = vmatpush1.msra.mxu0 0.0
        %1492 = vmatprep.subr.mxu0 0.0
        %1493 = vmatpush1.msra.mxu0 0.0
        %1494 = vmatprep.subr.mxu0 0.0
        %1495 = vmatpush1.msra.mxu0 0.0
        %1496 = vmatprep.subr.mxu0 0.0
        %1497 = vmatpush1.msra.mxu0 0.0
        %1498 = vmatprep.subr.mxu0 0.0
        %1499 = vmatpush1.msra.mxu0 0.0
        %1500 = vmatprep.subr.mxu0 0.0
        %1501 = vmatpush1.msra.mxu0 0.0
        %1502 = vmatprep.subr.mxu0 0.0
        %1503 = vmatpush1.msra.mxu0 0.0
        %1504 = vmatprep.subr.mxu0 0.0
        %1505 = vmatpush1.msra.mxu0 0.0
        %1506 = vmatprep.subr.mxu0 0.0
        %1507 = vmatpush1.msra.mxu0 0.0
        %1508 = vmatprep.subr.mxu0 0.0
        %1509 = vmatpush1.msra.mxu0 0.0
        %1510 = vmatprep.subr.mxu0 0.0
        %1511 = vmatpush1.msra.mxu0 0.0
        %1512 = vmatprep.subr.mxu0 0.0
        %1513 = vmatpush1.msra.mxu0 0.0
        %1514 = vmatprep.mubr.f32.mxu0 0.0
        %1515 = vmatmul.mubr.f32.gmra.mrb[0].mxu0 %v1444
        %v1516 = vpop.f32.mrb[0].mxu0
        %v1517 = vadd.f32 0.0, %v1516
        %v1518 = vpop.f32.mrb[0].mxu0
        %v1519 = vadd.f32 0.0, %v1518
        %1520 = vdwg.mxu0
        %1521 = vrot.lane.b32.xlu0 %v1426, 127
        %v1522 = vpop.permute.xlu0 %1521
        %1523 = vrot.lane.b32.xlu0 %v1434, 127
        %v1524 = vpop.permute.xlu0 %1523
        %1525 = vrot.lane.b32.xlu0 %v1427, 127
        %v1526 = vpop.permute.xlu0 %1525
        %v1527 = vsel %vm661, %v1522, %v1524
        %v1528 = vsel %vm661, %v1524, %v1526
        %v1530 = vsel %vm290, %v1429, 0
        %v1532 = vsel %vm294, %v1527, 0
        %v1534 = vsel %vm294, %v1528, 0
        %1536 = vmatprep.subr.mxu0 %v1534
        %1537 = vmatpush1.msra.mxu0 %v1532
        %1538 = vmatprep.subr.mxu0 0.0
        %1539 = vmatpush1.msra.mxu0 0.0
        %1540 = vmatprep.subr.mxu0 0.0
        %1541 = vmatpush1.msra.mxu0 0.0
        %1542 = vmatprep.subr.mxu0 0.0
        %1543 = vmatpush1.msra.mxu0 0.0
        %1544 = vmatprep.subr.mxu0 0.0
        %1545 = vmatpush1.msra.mxu0 0.0
        %1546 = vmatprep.subr.mxu0 0.0
        %1547 = vmatpush1.msra.mxu0 0.0
        %1548 = vmatprep.subr.mxu0 0.0
        %1549 = vmatpush1.msra.mxu0 0.0
        %1550 = vmatprep.subr.mxu0 0.0
        %1551 = vmatpush1.msra.mxu0 0.0
        %1552 = vmatprep.subr.mxu0 0.0
        %1553 = vmatpush1.msra.mxu0 0.0
        %1554 = vmatprep.subr.mxu0 0.0
        %1555 = vmatpush1.msra.mxu0 0.0
        %1556 = vmatprep.subr.mxu0 0.0
        %1557 = vmatpush1.msra.mxu0 0.0
        %1558 = vmatprep.subr.mxu0 0.0
        %1559 = vmatpush1.msra.mxu0 0.0
        %1560 = vmatprep.subr.mxu0 0.0
        %1561 = vmatpush1.msra.mxu0 0.0
        %1562 = vmatprep.subr.mxu0 0.0
        %1563 = vmatpush1.msra.mxu0 0.0
        %1564 = vmatprep.subr.mxu0 0.0
        %1565 = vmatpush1.msra.mxu0 0.0
        %1566 = vmatprep.subr.mxu0 0.0
        %1567 = vmatpush1.msra.mxu0 0.0
        %1568 = vmatprep.subr.mxu0 0.0
        %1569 = vmatpush1.msra.mxu0 0.0
        %1570 = vmatprep.subr.mxu0 0.0
        %1571 = vmatpush1.msra.mxu0 0.0
        %1572 = vmatprep.subr.mxu0 0.0
        %1573 = vmatpush1.msra.mxu0 0.0
        %1574 = vmatprep.subr.mxu0 0.0
        %1575 = vmatpush1.msra.mxu0 0.0
        %1576 = vmatprep.subr.mxu0 0.0
        %1577 = vmatpush1.msra.mxu0 0.0
        %1578 = vmatprep.subr.mxu0 0.0
        %1579 = vmatpush1.msra.mxu0 0.0
        %1580 = vmatprep.subr.mxu0 0.0
        %1581 = vmatpush1.msra.mxu0 0.0
        %1582 = vmatprep.subr.mxu0 0.0
        %1583 = vmatpush1.msra.mxu0 0.0
        %1584 = vmatprep.subr.mxu0 0.0
        %1585 = vmatpush1.msra.mxu0 0.0
        %1586 = vmatprep.subr.mxu0 0.0
        %1587 = vmatpush1.msra.mxu0 0.0
        %1588 = vmatprep.subr.mxu0 0.0
        %1589 = vmatpush1.msra.mxu0 0.0
        %1590 = vmatprep.subr.mxu0 0.0
        %1591 = vmatpush1.msra.mxu0 0.0
        %1592 = vmatprep.subr.mxu0 0.0
        %1593 = vmatpush1.msra.mxu0 0.0
        %1594 = vmatprep.subr.mxu0 0.0
        %1595 = vmatpush1.msra.mxu0 0.0
        %1596 = vmatprep.subr.mxu0 0.0
        %1597 = vmatpush1.msra.mxu0 0.0
        %1598 = vmatprep.subr.mxu0 0.0
        %1599 = vmatpush1.msra.mxu0 0.0
        %1600 = vmatprep.mubr.f32.mxu0 0.0
        %1601 = vmatmul.mubr.f32.gmra.mrb[0].mxu0 %v1530
        %v1602 = vpop.f32.mrb[0].mxu0
        %v1603 = vadd.f32 %v1517, %v1602
        %v1604 = vpop.f32.mrb[0].mxu0
        %v1605 = vadd.f32 %v1519, %v1604
        %1606 = vdwg.mxu0
        %v1607 = vld [vmem:[#allocation3] sm:$0xff]
        %v1608 = vld [vmem:[#allocation3 + $0x8] sm:$0xf]
        %s1609 = scalar_lea.vmem %s3, 28
        %v1610 = vld [vmem:[%s1609] sm:$0xf]
        %v1613 = vcombine.high %v1607, %v1607
        %1614 = vrot.lane.b32.xlu0 %v1607, 95
        %v1615 = vpop.permute.xlu0 %1614
        %1616 = vrot.lane.b32.xlu0 %v1613, 95
        %v1617 = vpop.permute.xlu0 %1616
        %1618 = vrot.lane.b32.xlu0 %v1608, 95
        %v1619 = vpop.permute.xlu0 %1618
        %v1620 = vsel %vm755, %v1615, %v1617
        %v1621 = vsel %vm755, %v1617, %v1619
        %v1623 = vsel %vm290, %v1610, 0
        %v1625 = vsel %vm294, %v1620, 0
        %v1627 = vsel %vm294, %v1621, 0
        %1629 = vmatprep.subr.mxu0 %v1627
        %1630 = vmatpush1.msra.mxu0 %v1625
        %1631 = vmatprep.subr.mxu0 0.0
        %1632 = vmatpush1.msra.mxu0 0.0
        %1633 = vmatprep.subr.mxu0 0.0
        %1634 = vmatpush1.msra.mxu0 0.0
        %1635 = vmatprep.subr.mxu0 0.0
        %1636 = vmatpush1.msra.mxu0 0.0
        %1637 = vmatprep.subr.mxu0 0.0
        %1638 = vmatpush1.msra.mxu0 0.0
        %1639 = vmatprep.subr.mxu0 0.0
        %1640 = vmatpush1.msra.mxu0 0.0
        %1641 = vmatprep.subr.mxu0 0.0
        %1642 = vmatpush1.msra.mxu0 0.0
        %1643 = vmatprep.subr.mxu0 0.0
        %1644 = vmatpush1.msra.mxu0 0.0
        %1645 = vmatprep.subr.mxu0 0.0
        %1646 = vmatpush1.msra.mxu0 0.0
        %1647 = vmatprep.subr.mxu0 0.0
        %1648 = vmatpush1.msra.mxu0 0.0
        %1649 = vmatprep.subr.mxu0 0.0
        %1650 = vmatpush1.msra.mxu0 0.0
        %1651 = vmatprep.subr.mxu0 0.0
        %1652 = vmatpush1.msra.mxu0 0.0
        %1653 = vmatprep.subr.mxu0 0.0
        %1654 = vmatpush1.msra.mxu0 0.0
        %1655 = vmatprep.subr.mxu0 0.0
        %1656 = vmatpush1.msra.mxu0 0.0
        %1657 = vmatprep.subr.mxu0 0.0
        %1658 = vmatpush1.msra.mxu0 0.0
        %1659 = vmatprep.subr.mxu0 0.0
        %1660 = vmatpush1.msra.mxu0 0.0
        %1661 = vmatprep.subr.mxu0 0.0
        %1662 = vmatpush1.msra.mxu0 0.0
        %1663 = vmatprep.subr.mxu0 0.0
        %1664 = vmatpush1.msra.mxu0 0.0
        %1665 = vmatprep.subr.mxu0 0.0
        %1666 = vmatpush1.msra.mxu0 0.0
        %1667 = vmatprep.subr.mxu0 0.0
        %1668 = vmatpush1.msra.mxu0 0.0
        %1669 = vmatprep.subr.mxu0 0.0
        %1670 = vmatpush1.msra.mxu0 0.0
        %1671 = vmatprep.subr.mxu0 0.0
        %1672 = vmatpush1.msra.mxu0 0.0
        %1673 = vmatprep.subr.mxu0 0.0
        %1674 = vmatpush1.msra.mxu0 0.0
        %1675 = vmatprep.subr.mxu0 0.0
        %1676 = vmatpush1.msra.mxu0 0.0
        %1677 = vmatprep.subr.mxu0 0.0
        %1678 = vmatpush1.msra.mxu0 0.0
        %1679 = vmatprep.subr.mxu0 0.0
        %1680 = vmatpush1.msra.mxu0 0.0
        %1681 = vmatprep.subr.mxu0 0.0
        %1682 = vmatpush1.msra.mxu0 0.0
        %1683 = vmatprep.subr.mxu0 0.0
        %1684 = vmatpush1.msra.mxu0 0.0
        %1685 = vmatprep.subr.mxu0 0.0
        %1686 = vmatpush1.msra.mxu0 0.0
        %1687 = vmatprep.subr.mxu0 0.0
        %1688 = vmatpush1.msra.mxu0 0.0
        %1689 = vmatprep.subr.mxu0 0.0
        %1690 = vmatpush1.msra.mxu0 0.0
        %1691 = vmatprep.subr.mxu0 0.0
        %1692 = vmatpush1.msra.mxu0 0.0
        %1693 = vmatprep.mubr.f32.mxu0 0.0
        %1694 = vmatmul.mubr.f32.gmra.mrb[0].mxu0 %v1623
        %v1695 = vpop.f32.mrb[0].mxu0
        %v1696 = vadd.f32 0.0, %v1695
        %v1697 = vpop.f32.mrb[0].mxu0
        %v1698 = vadd.f32 0.0, %v1697
        %1699 = vdwg.mxu0
        %v1700 = vadd.f32 %v1603, %v1696
        %v1701 = vadd.f32 %v1605, %v1698
        %v1702 = vadd.f32 %v1424, %v1700
        %v1703 = vadd.f32 %v1425, %v1701
        %v1704 = vld [vmem:[#allocation3] sm:$0xff]
        %v1705 = vld [vmem:[#allocation3 + $0x8] sm:$0xf]
        %s1706 = scalar_lea.vmem %s3, 8
        %v1707 = vld [vmem:[%s1706] sm:$0xf]
        %s1708 = scalar_lea.vmem %s3, 20
        %v1709 = vld [vmem:[%s1708] sm:$0xf]
        %v1712 = vcombine.high %v1704, %v1704
        %1713 = vrot.lane.b32.xlu0 %v1704, 110
        %v1714 = vpop.permute.xlu0 %1713
        %1715 = vrot.lane.b32.xlu0 %v1712, 110
        %v1716 = vpop.permute.xlu0 %1715
        %1717 = vrot.lane.b32.xlu0 %v1705, 110
        %v1718 = vpop.permute.xlu0 %1717
        %v1719 = vsel %vm855, %v1714, %v1716
        %v1720 = vsel %vm855, %v1716, %v1718
        %v1722 = vsel %vm290, %v1709, 0
        %v1724 = vsel %vm294, %v1719, 0
        %v1726 = vsel %vm294, %v1720, 0
        %1728 = vmatprep.subr.mxu0 %v1726
        %1729 = vmatpush1.msra.mxu0 %v1724
        %1730 = vmatprep.subr.mxu0 0.0
        %1731 = vmatpush1.msra.mxu0 0.0
        %1732 = vmatprep.subr.mxu0 0.0
        %1733 = vmatpush1.msra.mxu0 0.0
        %1734 = vmatprep.subr.mxu0 0.0
        %1735 = vmatpush1.msra.mxu0 0.0
        %1736 = vmatprep.subr.mxu0 0.0
        %1737 = vmatpush1.msra.mxu0 0.0
        %1738 = vmatprep.subr.mxu0 0.0
        %1739 = vmatpush1.msra.mxu0 0.0
        %1740 = vmatprep.subr.mxu0 0.0
        %1741 = vmatpush1.msra.mxu0 0.0
        %1742 = vmatprep.subr.mxu0 0.0
        %1743 = vmatpush1.msra.mxu0 0.0
        %1744 = vmatprep.subr.mxu0 0.0
        %1745 = vmatpush1.msra.mxu0 0.0
        %1746 = vmatprep.subr.mxu0 0.0
        %1747 = vmatpush1.msra.mxu0 0.0
        %1748 = vmatprep.subr.mxu0 0.0
        %1749 = vmatpush1.msra.mxu0 0.0
        %1750 = vmatprep.subr.mxu0 0.0
        %1751 = vmatpush1.msra.mxu0 0.0
        %1752 = vmatprep.subr.mxu0 0.0
        %1753 = vmatpush1.msra.mxu0 0.0
        %1754 = vmatprep.subr.mxu0 0.0
        %1755 = vmatpush1.msra.mxu0 0.0
        %1756 = vmatprep.subr.mxu0 0.0
        %1757 = vmatpush1.msra.mxu0 0.0
        %1758 = vmatprep.subr.mxu0 0.0
        %1759 = vmatpush1.msra.mxu0 0.0
        %1760 = vmatprep.subr.mxu0 0.0
        %1761 = vmatpush1.msra.mxu0 0.0
        %1762 = vmatprep.subr.mxu0 0.0
        %1763 = vmatpush1.msra.mxu0 0.0
        %1764 = vmatprep.subr.mxu0 0.0
        %1765 = vmatpush1.msra.mxu0 0.0
        %1766 = vmatprep.subr.mxu0 0.0
        %1767 = vmatpush1.msra.mxu0 0.0
        %1768 = vmatprep.subr.mxu0 0.0
        %1769 = vmatpush1.msra.mxu0 0.0
        %1770 = vmatprep.subr.mxu0 0.0
        %1771 = vmatpush1.msra.mxu0 0.0
        %1772 = vmatprep.subr.mxu0 0.0
        %1773 = vmatpush1.msra.mxu0 0.0
        %1774 = vmatprep.subr.mxu0 0.0
        %1775 = vmatpush1.msra.mxu0 0.0
        %1776 = vmatprep.subr.mxu0 0.0
        %1777 = vmatpush1.msra.mxu0 0.0
        %1778 = vmatprep.subr.mxu0 0.0
        %1779 = vmatpush1.msra.mxu0 0.0
        %1780 = vmatprep.subr.mxu0 0.0
        %1781 = vmatpush1.msra.mxu0 0.0
        %1782 = vmatprep.subr.mxu0 0.0
        %1783 = vmatpush1.msra.mxu0 0.0
        %1784 = vmatprep.subr.mxu0 0.0
        %1785 = vmatpush1.msra.mxu0 0.0
        %1786 = vmatprep.subr.mxu0 0.0
        %1787 = vmatpush1.msra.mxu0 0.0
        %1788 = vmatprep.subr.mxu0 0.0
        %1789 = vmatpush1.msra.mxu0 0.0
        %1790 = vmatprep.subr.mxu0 0.0
        %1791 = vmatpush1.msra.mxu0 0.0
        %1792 = vmatprep.mubr.f32.mxu0 0.0
        %1793 = vmatmul.mubr.f32.gmra.mrb[0].mxu0 %v1722
        %v1794 = vpop.f32.mrb[0].mxu0
        %v1795 = vadd.f32 0.0, %v1794
        %v1796 = vpop.f32.mrb[0].mxu0
        %v1797 = vadd.f32 0.0, %v1796
        %1798 = vdwg.mxu0
        %1799 = vrot.lane.b32.xlu0 %v1704, 126
        %v1800 = vpop.permute.xlu0 %1799
        %1801 = vrot.lane.b32.xlu0 %v1712, 126
        %v1802 = vpop.permute.xlu0 %1801
        %1803 = vrot.lane.b32.xlu0 %v1705, 126
        %v1804 = vpop.permute.xlu0 %1803
        %v1805 = vsel %vm942, %v1800, %v1802
        %v1806 = vsel %vm942, %v1802, %v1804
        %v1808 = vsel %vm290, %v1707, 0
        %v1810 = vsel %vm294, %v1805, 0
        %v1812 = vsel %vm294, %v1806, 0
        %1814 = vmatprep.subr.mxu0 %v1812
        %1815 = vmatpush1.msra.mxu0 %v1810
        %1816 = vmatprep.subr.mxu0 0.0
        %1817 = vmatpush1.msra.mxu0 0.0
        %1818 = vmatprep.subr.mxu0 0.0
        %1819 = vmatpush1.msra.mxu0 0.0
        %1820 = vmatprep.subr.mxu0 0.0
        %1821 = vmatpush1.msra.mxu0 0.0
        %1822 = vmatprep.subr.mxu0 0.0
        %1823 = vmatpush1.msra.mxu0 0.0
        %1824 = vmatprep.subr.mxu0 0.0
        %1825 = vmatpush1.msra.mxu0 0.0
        %1826 = vmatprep.subr.mxu0 0.0
        %1827 = vmatpush1.msra.mxu0 0.0
        %1828 = vmatprep.subr.mxu0 0.0
        %1829 = vmatpush1.msra.mxu0 0.0
        %1830 = vmatprep.subr.mxu0 0.0
        %1831 = vmatpush1.msra.mxu0 0.0
        %1832 = vmatprep.subr.mxu0 0.0
        %1833 = vmatpush1.msra.mxu0 0.0
        %1834 = vmatprep.subr.mxu0 0.0
        %1835 = vmatpush1.msra.mxu0 0.0
        %1836 = vmatprep.subr.mxu0 0.0
        %1837 = vmatpush1.msra.mxu0 0.0
        %1838 = vmatprep.subr.mxu0 0.0
        %1839 = vmatpush1.msra.mxu0 0.0
        %1840 = vmatprep.subr.mxu0 0.0
        %1841 = vmatpush1.msra.mxu0 0.0
        %1842 = vmatprep.subr.mxu0 0.0
        %1843 = vmatpush1.msra.mxu0 0.0
        %1844 = vmatprep.subr.mxu0 0.0
        %1845 = vmatpush1.msra.mxu0 0.0
        %1846 = vmatprep.subr.mxu0 0.0
        %1847 = vmatpush1.msra.mxu0 0.0
        %1848 = vmatprep.subr.mxu0 0.0
        %1849 = vmatpush1.msra.mxu0 0.0
        %1850 = vmatprep.subr.mxu0 0.0
        %1851 = vmatpush1.msra.mxu0 0.0
        %1852 = vmatprep.subr.mxu0 0.0
        %1853 = vmatpush1.msra.mxu0 0.0
        %1854 = vmatprep.subr.mxu0 0.0
        %1855 = vmatpush1.msra.mxu0 0.0
        %1856 = vmatprep.subr.mxu0 0.0
        %1857 = vmatpush1.msra.mxu0 0.0
        %1858 = vmatprep.subr.mxu0 0.0
        %1859 = vmatpush1.msra.mxu0 0.0
        %1860 = vmatprep.subr.mxu0 0.0
        %1861 = vmatpush1.msra.mxu0 0.0
        %1862 = vmatprep.subr.mxu0 0.0
        %1863 = vmatpush1.msra.mxu0 0.0
        %1864 = vmatprep.subr.mxu0 0.0
        %1865 = vmatpush1.msra.mxu0 0.0
        %1866 = vmatprep.subr.mxu0 0.0
        %1867 = vmatpush1.msra.mxu0 0.0
        %1868 = vmatprep.subr.mxu0 0.0
        %1869 = vmatpush1.msra.mxu0 0.0
        %1870 = vmatprep.subr.mxu0 0.0
        %1871 = vmatpush1.msra.mxu0 0.0
        %1872 = vmatprep.subr.mxu0 0.0
        %1873 = vmatpush1.msra.mxu0 0.0
        %1874 = vmatprep.subr.mxu0 0.0
        %1875 = vmatpush1.msra.mxu0 0.0
        %1876 = vmatprep.subr.mxu0 0.0
        %1877 = vmatpush1.msra.mxu0 0.0
        %1878 = vmatprep.mubr.f32.mxu0 0.0
        %1879 = vmatmul.mubr.f32.gmra.mrb[0].mxu0 %v1808
        %v1880 = vpop.f32.mrb[0].mxu0
        %v1881 = vadd.f32 %v1795, %v1880
        %v1882 = vpop.f32.mrb[0].mxu0
        %v1883 = vadd.f32 %v1797, %v1882
        %1884 = vdwg.mxu0
        %v1885 = vld [vmem:[#allocation3] sm:$0xff]
        %v1886 = vld [vmem:[#allocation3 + $0x8] sm:$0xf]
        %s1887 = scalar_lea.vmem %s3, 32
        %v1888 = vld [vmem:[%s1887] sm:$0xf]
        %v1891 = vcombine.high %v1885, %v1885
        %1892 = vrot.lane.b32.xlu0 %v1885, 94
        %v1893 = vpop.permute.xlu0 %1892
        %1894 = vrot.lane.b32.xlu0 %v1891, 94
        %v1895 = vpop.permute.xlu0 %1894
        %1896 = vrot.lane.b32.xlu0 %v1886, 94
        %v1897 = vpop.permute.xlu0 %1896
        %v1898 = vsel %vm1036, %v1893, %v1895
        %v1899 = vsel %vm1036, %v1895, %v1897
        %v1901 = vsel %vm290, %v1888, 0
        %v1903 = vsel %vm294, %v1898, 0
        %v1905 = vsel %vm294, %v1899, 0
        %1907 = vmatprep.subr.mxu0 %v1905
        %1908 = vmatpush1.msra.mxu0 %v1903
        %1909 = vmatprep.subr.mxu0 0.0
        %1910 = vmatpush1.msra.mxu0 0.0
        %1911 = vmatprep.subr.mxu0 0.0
        %1912 = vmatpush1.msra.mxu0 0.0
        %1913 = vmatprep.subr.mxu0 0.0
        %1914 = vmatpush1.msra.mxu0 0.0
        %1915 = vmatprep.subr.mxu0 0.0
        %1916 = vmatpush1.msra.mxu0 0.0
        %1917 = vmatprep.subr.mxu0 0.0
        %1918 = vmatpush1.msra.mxu0 0.0
        %1919 = vmatprep.subr.mxu0 0.0
        %1920 = vmatpush1.msra.mxu0 0.0
        %1921 = vmatprep.subr.mxu0 0.0
        %1922 = vmatpush1.msra.mxu0 0.0
        %1923 = vmatprep.subr.mxu0 0.0
        %1924 = vmatpush1.msra.mxu0 0.0
        %1925 = vmatprep.subr.mxu0 0.0
        %1926 = vmatpush1.msra.mxu0 0.0
        %1927 = vmatprep.subr.mxu0 0.0
        %1928 = vmatpush1.msra.mxu0 0.0
        %1929 = vmatprep.subr.mxu0 0.0
        %1930 = vmatpush1.msra.mxu0 0.0
        %1931 = vmatprep.subr.mxu0 0.0
        %1932 = vmatpush1.msra.mxu0 0.0
        %1933 = vmatprep.subr.mxu0 0.0
        %1934 = vmatpush1.msra.mxu0 0.0
        %1935 = vmatprep.subr.mxu0 0.0
        %1936 = vmatpush1.msra.mxu0 0.0
        %1937 = vmatprep.subr.mxu0 0.0
        %1938 = vmatpush1.msra.mxu0 0.0
        %1939 = vmatprep.subr.mxu0 0.0
        %1940 = vmatpush1.msra.mxu0 0.0
        %1941 = vmatprep.subr.mxu0 0.0
        %1942 = vmatpush1.msra.mxu0 0.0
        %1943 = vmatprep.subr.mxu0 0.0
        %1944 = vmatpush1.msra.mxu0 0.0
        %1945 = vmatprep.subr.mxu0 0.0
        %1946 = vmatpush1.msra.mxu0 0.0
        %1947 = vmatprep.subr.mxu0 0.0
        %1948 = vmatpush1.msra.mxu0 0.0
        %1949 = vmatprep.subr.mxu0 0.0
        %1950 = vmatpush1.msra.mxu0 0.0
        %1951 = vmatprep.subr.mxu0 0.0
        %1952 = vmatpush1.msra.mxu0 0.0
        %1953 = vmatprep.subr.mxu0 0.0
        %1954 = vmatpush1.msra.mxu0 0.0
        %1955 = vmatprep.subr.mxu0 0.0
        %1956 = vmatpush1.msra.mxu0 0.0
        %1957 = vmatprep.subr.mxu0 0.0
        %1958 = vmatpush1.msra.mxu0 0.0
        %1959 = vmatprep.subr.mxu0 0.0
        %1960 = vmatpush1.msra.mxu0 0.0
        %1961 = vmatprep.subr.mxu0 0.0
        %1962 = vmatpush1.msra.mxu0 0.0
        %1963 = vmatprep.subr.mxu0 0.0
        %1964 = vmatpush1.msra.mxu0 0.0
        %1965 = vmatprep.subr.mxu0 0.0
        %1966 = vmatpush1.msra.mxu0 0.0
        %1967 = vmatprep.subr.mxu0 0.0
        %1968 = vmatpush1.msra.mxu0 0.0
        %1969 = vmatprep.subr.mxu0 0.0
        %1970 = vmatpush1.msra.mxu0 0.0
        %1971 = vmatprep.mubr.f32.mxu0 0.0
        %1972 = vmatmul.mubr.f32.gmra.mrb[0].mxu0 %v1901
        %v1973 = vpop.f32.mrb[0].mxu0
        %v1974 = vadd.f32 0.0, %v1973
        %v1975 = vpop.f32.mrb[0].mxu0
        %v1976 = vadd.f32 0.0, %v1975
        %1977 = vdwg.mxu0
        %v1978 = vadd.f32 %v1881, %v1974
        %v1979 = vadd.f32 %v1883, %v1976
        %v1980 = vmul.f32 %v1978, %v1123
        %v1981 = vmul.f32 %v1979, %v1127
        %v1982 = vadd.f32 %v1702, %v1980
        %v1983 = vadd.f32 %v1703, %v1981
        %v1984 = vld [vmem:[%s4] sm:$0xf]
        %1986 = vset.pattern.permute.xlu0 0
        %1987 = vperm.xlu0 %1986, %v1984
        %v1988 = vpop.permute.xlu0 %1987
        %v1990 = vadd.f32 %v1982, %v1988
        %v1991 = vadd.f32 %v1983, %v1988
        %v1992 = vcombine.high %v250, %v250
        %v1994 = vadd.f32 %v1990, %v250
        %v1995 = vadd.f32 %v1991, %v1992
        %v1996 = vmax.f32 %v1994, 0.0
        %v1997 = vmax.f32 %v1995, 0.0
        %v2000 = vcombine.low %v1996, %v1997
        %2002 = vst [vmem:[%s244] sm:$0xff] %v2000
        %s2003 = sand.u32 %s159, 1
        %s2004 = scalar_lea.sflag [#allocation5], %s2003
        %s2005 = sand.u32 %s159, 1
        %s2006 = smul.addr %s2005, 8
        %s2007 = scalar_lea.vmem [#allocation4], %s2006
        // Predicated region
        $region45: #{tpu_custom_call.1} parent=43 // pred_check
          %p2008 = pneg %p169
        $region46: #{tpu_custom_call.1} parent=43 // pred_check_branch
          %2010 = sbr.rel (%p2008) target = $region48
        $region47: #{tpu_custom_call.1} parent=43 // pred_region
          %s2012 = ssub.s32 128, 128
          %2013 = vsyncadd %s2004, %s2012
          %s2014 = smul.addr %s20, 2
          %s2015 = smul.addr %s2014, 64
          %s2016 = scalar_lea.hbm %s6, %s2015
          %s2018 = sshll.u32 %s2007, 4
          %s2019 = int_to_ptr.vmem [resolvable:$true] %s2018
          %2021 = dma.vmem_to_hbm [thread:$0]  %s2019, 128, %s2016, %s2004
        $region48: #{tpu_custom_call.1} parent=43 // pred_fallthru
          _
      $region44: #{tpu_custom_call.1} parent=5 // pred_fallthru
        _
      %p2022 = scmp.le.s32.totalorder 2, %s15
      // Predicated region
      $region49: #{tpu_custom_call.1} parent=5 // pred_check
        %p2023 = pneg %p2022
      $region50: #{tpu_custom_call.1} parent=5 // pred_check_branch
        %2025 = sbr.rel (%p2023) target = $region52
      $region51: #{tpu_custom_call.1} parent=5 // pred_region
        %s2026 = ssub.s32 %s15, 2
        // Predicated region
        $region53: #{tpu_custom_call.1} parent=51 // pred_check
          %p2027 = pneg %p175
        $region54: #{tpu_custom_call.1} parent=51 // pred_check_branch
          %2029 = sbr.rel (%p2027) target = $region56
        $region55: #{tpu_custom_call.1} parent=51 // pred_region
          %s2030 = sand.u32 %s160, 1
          %s2031 = scalar_lea.sflag [#allocation5], %s2030
          %s2032 = sand.u32 %s160, 1
          %s2033 = smul.addr %s2032, 8
          %s2034 = scalar_lea.vmem [#allocation4], %s2033
          %2035 = dma.done %s2031, 128
        $region56: #{tpu_custom_call.1} parent=51 // pred_fallthru
          _
      $region52: #{tpu_custom_call.1} parent=5 // pred_fallthru
        _
    $region6: #{tpu_custom_call.1} parent=1 // loop_footer
      %s19 = sadd.s32 1, %s15
    $region7: #{tpu_custom_call.1} parent=1 // loop_footer_branch
      %14 = sbr.rel target = $region3
    $region8: #{tpu_custom_call.1} parent=1 // loop_exit
      _
    %2036 = vsyncpa [#allocation5], 1
    %s2037 = scalar_lea.sflag [#allocation5], 1
    %2038 = vsyncpa %s2037, 1

</llo_original>
